<compile_context>
chip_gen: v6e
topology: v6e:2x2x1
jax: 0.10.0
libtpu: 0.0.40
codegen_flags: <defaults>
</compile_context>

<pallas_src>
import jax
import jax.numpy as jnp
from jax.experimental import pallas as pl
from jax.experimental.pallas import tpu as pltpu


def _round_up(x, m):
    return ((x + m - 1) // m) * m


def _pick_rows_per_chunk(tile_h, wc, tc, requested, budget_bytes=128 * 1024):
    """Rows of output height accumulated per single-store chunk."""
    if requested is not None:
        rh = max(1, min(int(requested), tile_h))
        while tile_h % rh:
            rh -= 1
        return rh
    best = 1
    for d in range(1, tile_h + 1):
        if tile_h % d == 0 and d * wc * tc * 4 <= budget_bytes:
            best = d
    return best


def _make_fpn_conv_kernel(*, TH, Wc, cin_p, TC, n_ct, RH):
    """Builds the kernel closure.

    Refs (in order):
      x_hbm:    (N, Hp+2, Wbuf, cin_p)  padded NHWC input, left in HBM (pl.ANY)
      w_ref:    (9*cin_p, cout_p)       BN-folded weights, resident in VMEM
      b_ref:    (1, cout_p) f32         BN-folded bias, resident in VMEM
      o_ref:    (1, TH, Wc, cout_p)     output block
      xbuf:     (2, TH+2, Wbuf, cin_p)  double-buffered halo slab (scratch)
      copy_sem: DMA((2,))               one semaphore per slab buffer
    """
    n_rc = TH // RH

    def kernel(x_hbm, w_ref, b_ref, o_ref, xbuf, copy_sem):
        n = pl.program_id(0)
        h = pl.program_id(1)
        nh = pl.num_programs(1)
        slot = h % 2

        def start_fetch(h_idx, slot_idx):
            row0 = h_idx * TH
            if not isinstance(row0, int):
                row0 = pl.multiple_of(row0, 8)   # TH is a multiple of 8
            pltpu.make_async_copy(
                x_hbm.at[n, pl.ds(row0, TH + 2)],
                xbuf.at[slot_idx],
                copy_sem.at[slot_idx],
            ).start()

        # First row-tile of this image: nothing was prefetched yet.
        @pl.when(h == 0)
        def _():
            start_fetch(0, 0)

        # Wait for this tile's halo slab (started above, or prefetched by the
        # previous row-tile step of this image).
        pltpu.make_async_copy(
            x_hbm.at[n, pl.ds(0, TH + 2)], xbuf.at[slot], copy_sem.at[slot]
        ).wait()

        # Prefetch the next row-tile's slab into the other buffer; the DMA is
        # hidden behind this tile's matmuls.
        @pl.when(h + 1 < nh)
        def _():
            start_fetch(h + 1, 1 - slot)

        # --- compute: 3x3 conv as 9 shifted matmuls, accumulated in a value
        # --- per (row-chunk, Cout-tile) so each output element is stored once.
        def row_chunk(rc):
            r0 = rc * RH
            for ct in range(n_ct):
                c0 = ct * TC
                acc = None
                for ky in range(3):
                    for kx in range(3):
                        tap = 3 * ky + kx
                        lhs = xbuf[slot, pl.ds(r0 + ky, RH), kx:kx + Wc, :]
                        # Wc is a multiple of 8 -> this reshape is a layout
                        # no-op (no tile-boundary-crossing copy).
                        lhs = lhs.reshape(RH * Wc, cin_p)
                        rhs = w_ref[tap * cin_p:(tap + 1) * cin_p, c0:c0 + TC]
                        d = jnp.dot(lhs, rhs,
                                    preferred_element_type=jnp.float32)
                        acc = d if acc is None else acc + d
                y = jnp.maximum(acc + b_ref[:, c0:c0 + TC], 0.0)
                o_ref[0, pl.ds(r0, RH), :, c0:c0 + TC] = (
                    y.reshape(RH, Wc, TC).astype(o_ref.dtype))

        if n_rc <= 8:
            for rc in range(n_rc):        # small, static unroll
                row_chunk(rc)
        else:
            @pl.loop(0, n_rc)             # bounded code size for large tiles
            def _(rc):
                row_chunk(rc)

    return kernel


def fpn_conv(x_nchw, weight_oihw, bn_gamma, bn_beta, bn_mean, bn_var, *,
             eps=1e-5, tile_h=None, tile_cout=None, rows_per_chunk=None,
             compute_dtype=jnp.bfloat16, out_dtype=jnp.float32):
    """Conv2d(3x3, pad=1, bias=False) + BatchNorm2d (inference) + ReLU.

    x_nchw: (N, Cin, H, W) float32. Returns (N, Cout, H, W) in out_dtype.
    compute_dtype defaults to bf16 (f32 MXU accumulation); pass jnp.float32
    for f32-exact Conv+BN+ReLU.
    """
    N, Cin, H, W = x_nchw.shape
    Cout = weight_oihw.shape[0]
    if weight_oihw.shape != (Cout, Cin, 3, 3):
        raise ValueError(f"bad weight shape {weight_oihw.shape}")

    LANE = 128
    cin_p = _round_up(Cin, LANE)
    cout_p = _round_up(Cout, LANE)
    in_item = jnp.dtype(compute_dtype).itemsize
    out_item = jnp.dtype(out_dtype).itemsize

    # Compute width padded to a sublane multiple so in-kernel reshapes are
    # layout no-ops; the slab width covers Wc + 2 halo columns (all padding
    # columns read only zero-padded input, so the throwaway output columns
    # are harmless and get sliced off below).
    Wc = _round_up(W, 8)
    w_buf = _round_up(Wc + 2, 8)

    if tile_cout is None:
        # v6e/v7x MXU is 2x256x256 -> prefer 256; v5e (4x128x128) likes 128.
        tile_cout = 256 if cout_p % 256 == 0 else 128
    if cout_p % tile_cout or tile_cout % 128:
        raise ValueError("tile_cout must be a multiple of 128 dividing padded Cout")
    n_ct = cout_p // tile_cout

    try:
        vmem_cap = int(pltpu.get_tpu_info().vmem_capacity_bytes)
    except Exception:  # pragma: no cover - interpret mode / old runtimes
        vmem_cap = 64 * 1024 * 1024

    if tile_h is None:
        # Target ~30% of physical VMEM per step; the rest is double-buffering
        # slack and matmul temporaries.
        budget = int(0.30 * vmem_cap)
        per_row = 2 * w_buf * cin_p * in_item + 2 * Wc * cout_p * out_item
        fixed = (4 * w_buf * cin_p * in_item          # halo rows, both slabs
                 + 2 * 9 * cin_p * cout_p * in_item   # resident weights
                 + (4 << 20))                         # temporaries / margin
        tile_h = max(8, (budget - fixed) // max(per_row, 1))
    tile_h = int(max(8, min(int(tile_h), _round_up(H, 8))))
    tile_h = (tile_h // 8) * 8

    h_extra = (-H) % tile_h
    hp = H + h_extra
    n_h = hp // tile_h

    RH = _pick_rows_per_chunk(tile_h, Wc, tile_cout, rows_per_chunk)

    # ---- Fold BatchNorm (inference) into the conv weights + a bias vector ----
    # TODO(synk): training-mode BN (batch statistics) is not reproduced here.
    scale = (bn_gamma.astype(jnp.float32)
             / jnp.sqrt(bn_var.astype(jnp.float32) + eps))             # (Cout,)
    bias = bn_beta.astype(jnp.float32) - bn_mean.astype(jnp.float32) * scale
    w = weight_oihw.astype(jnp.float32) * scale[:, None, None, None]   # OIHW
    w_hwio = jnp.transpose(w, (2, 3, 1, 0))                            # (3,3,Cin,Cout)
    w_mat = jnp.pad(w_hwio,
                    ((0, 0), (0, 0), (0, cin_p - Cin), (0, cout_p - Cout)))
    w_mat = w_mat.reshape(9 * cin_p, cout_p).astype(compute_dtype)
    b_vec = jnp.pad(bias, (0, cout_p - Cout)).reshape(1, cout_p)

    # ---- NCHW -> NHWC, zero-pad halo + alignment + channels to 128 lanes ----
    # TODO(synk): accept/produce NHWC directly to drop these relayout passes.
    x_nhwc = jnp.transpose(x_nchw, (0, 2, 3, 1)).astype(compute_dtype)
    x_pad = jnp.pad(
        x_nhwc,
        ((0, 0), (1, 1 + h_extra), (1, w_buf - 1 - W), (0, cin_p - Cin)))

    kernel = _make_fpn_conv_kernel(TH=tile_h, Wc=Wc, cin_p=cin_p,
                                   TC=tile_cout, n_ct=n_ct, RH=RH)

    est_vmem = (2 * (tile_h + 2) * w_buf * cin_p * in_item   # slab (2 slots)
                + 2 * 9 * cin_p * cout_p * in_item           # weights (2 bufs)
                + 2 * 8 * cout_p * 4                         # bias
                + 2 * tile_h * Wc * cout_p * out_item        # out block (2 bufs)
                + 6 * RH * Wc * tile_cout * 4                # matmul temporaries
                + (2 << 20))
    vmem_limit = int(min(max(est_vmem, 32 << 20), int(0.9 * vmem_cap)))

    out_nhwc = pl.pallas_call(
        kernel,
        out_shape=jax.ShapeDtypeStruct((N, hp, Wc, cout_p), out_dtype),
        grid_spec=pltpu.PrefetchScalarGridSpec(
            num_scalar_prefetch=0,
            grid=(N, n_h),
            in_specs=[
                pl.BlockSpec(memory_space=pl.ANY),   # x_pad stays in HBM
                # Constant block index -> weights / bias are DMA'd once and
                # stay resident in VMEM across all grid steps.
                # TODO(synk): pipeline_mode=pl.Buffered(1) would drop the
                # unused second buffer for these constant blocks.
                pl.BlockSpec((9 * cin_p, cout_p), lambda n, h: (0, 0)),
                pl.BlockSpec((1, cout_p), lambda n, h: (0, 0)),
            ],
            out_specs=pl.BlockSpec((1, tile_h, Wc, cout_p),
                                   lambda n, h: (n, h, 0, 0)),
            scratch_shapes=[
                pltpu.VMEM((2, tile_h + 2, w_buf, cin_p), compute_dtype),
                pltpu.SemaphoreType.DMA((2,)),
            ],
        ),
        compiler_params=pltpu.CompilerParams(
            # The slab prefetch chain is carried across the row-tile axis
            # ("arbitrary"); batch images are independent ("parallel").
            # TODO(synk): on v7x (2 TCs) with N == 1, split the row-tile axis
            # into an outer "parallel" band axis + inner "arbitrary" axis.
            dimension_semantics=("parallel", "arbitrary"),
            vmem_limit_bytes=vmem_limit,
        ),
    )(x_pad, w_mat, b_vec)

    # Drop row/width/channel padding and return to NCHW.
    return jnp.transpose(out_nhwc[:, :H, :W, :Cout], (0, 3, 1, 2))


if __name__ == "__main__":
    key = jax.random.PRNGKey(0)
    k_x, k_w, k_x2, k_w2 = jax.random.split(key, 4)

    def make_bn(cout):
        i = jnp.arange(cout, dtype=jnp.float32)
        return 1.0 + 0.05 * i, 0.02 * i - 0.03, 0.1 * jnp.cos(i), 1.0 + 0.1 * i

    def module_ref(x, w, gamma, beta, mean, var, eps=1e-5, match_bf16=False):
        scale = gamma / jnp.sqrt(var + eps)
        bias = beta - mean * scale
        if match_bf16:
            # Match the kernel's bf16 activations / BN-folded bf16 weights
            # with f32 accumulation.
            x = x.astype(jnp.bfloat16).astype(jnp.float32)
            w = (w * scale[:, None, None, None]
                 ).astype(jnp.bfloat16).astype(jnp.float32)
            y = jax.lax.conv_general_dilated(
                x, w, (1, 1), "SAME",
                dimension_numbers=("NCHW", "OIHW", "NCHW"))
            y = y + bias[None, :, None, None]
        else:
            y = jax.lax.conv_general_dilated(
                x, w, (1, 1), "SAME",
                dimension_numbers=("NCHW", "OIHW", "NCHW"))
            y = y * scale[None, :, None, None] + bias[None, :, None, None]
        return jnp.maximum(y, 0.0)

    # ---- Test 1: bf16 compute, tile_h=8 -> two row-tiles per image, so the
    # ---- double-buffered slab prefetch chain is exercised (and N=2). ----
    N, Cin, Cout, H, W = 2, 4, 8, 16, 16
    x = jax.random.normal(k_x, (N, Cin, H, W), dtype=jnp.float32)
    w = jax.random.normal(k_w, (Cout, Cin, 3, 3), dtype=jnp.float32)
    w = w * (2.0 / (Cin * 9)) ** 0.5
    gamma, beta, mean, var = make_bn(Cout)

    out = fpn_conv(x, w, gamma, beta, mean, var, tile_h=8)
    out = jax.block_until_ready(out)
    assert out.shape == (N, Cout, H, W)
    ref = module_ref(x, w, gamma, beta, mean, var, match_bf16=True)
    assert jnp.allclose(out, ref, atol=2e-3, rtol=2e-3), (
        float(jnp.max(jnp.abs(out - ref))))

    # ---- Test 2: odd sizes (H/W/channel padding), f32 compute, default
    # ---- tile_h (heuristic), rows_per_chunk=1 -> dynamic row-chunk loop. ----
    N2, Cin2, Cout2, H2, W2 = 1, 3, 5, 10, 12
    x2 = jax.random.normal(k_x2, (N2, Cin2, H2, W2), dtype=jnp.float32)
    w2 = jax.random.normal(k_w2, (Cout2, Cin2, 3, 3), dtype=jnp.float32)
    w2 = w2 * (2.0 / (Cin2 * 9)) ** 0.5
    gamma2, beta2, mean2, var2 = make_bn(Cout2)

    out2 = fpn_conv(x2, w2, gamma2, beta2, mean2, var2,
                    rows_per_chunk=1, compute_dtype=jnp.float32)
    out2 = jax.block_until_ready(out2)
    assert out2.shape == (N2, Cout2, H2, W2)
    ref2 = module_ref(x2, w2, gamma2, beta2, mean2, var2, match_bf16=False)
    assert jnp.allclose(out2, ref2, atol=1e-3, rtol=1e-3), (
        float(jnp.max(jnp.abs(out2 - ref2))))

    print("KERNEL_OK")
</pallas_src>

<mosaic_0001>
module attributes {stable_mosaic.version = 11 : i64} {
  func.func @kernel(%arg0: i32, %arg1: i32, %arg2: memref<2x18x24x128xbf16, #tpu.memory_space<any>>, %arg3: memref<1152x128xbf16, #tpu.memory_space<vmem>>, %arg4: memref<1x128xf32, #tpu.memory_space<vmem>>, %arg5: memref<1x8x16x128xf32, #tpu.memory_space<vmem>>, %arg6: memref<2x10x24x128xbf16, #tpu.memory_space<vmem>>, %arg7: memref<2x!tpu.dma_semaphore, #tpu.memory_space<semaphore_mem>>) attributes {dimension_semantics = [#tpu.dimension_semantics<parallel>, #tpu.dimension_semantics<arbitrary>], iteration_bounds = array<i64: 2, 2>, scalar_prefetch = 0 : i64, scratch_operands = 2 : i64, tpu.core_type = #tpu.core_type<tc>, window_params = [{}, {pipeline_mode = #tpu.pipeline_mode<synchronous>, transform_indices = @transform_1, window_bounds = array<i64: 1152, 128>}, {pipeline_mode = #tpu.pipeline_mode<synchronous>, transform_indices = @transform_2, window_bounds = array<i64: 1, 128>}, {transform_indices = @transform_3, window_bounds = array<i64: 1, 8, 16, 128>}]} {
    %c2_i32 = arith.constant 2 : i32
    %c0_i32 = arith.constant 0 : i32
    %0 = arith.cmpi eq, %c2_i32, %c0_i32 : i32
    %c1_i32 = arith.constant 1 : i32
    %1 = arith.select %0, %c1_i32, %c2_i32 : i32
    %2 = arith.remsi %arg1, %1 : i32
    %c0_i32_0 = arith.constant 0 : i32
    %3 = arith.cmpi ne, %2, %c0_i32_0 : i32
    %c0_i32_1 = arith.constant 0 : i32
    %4 = arith.cmpi slt, %2, %c0_i32_1 : i32
    %c0_i32_2 = arith.constant 0 : i32
    %5 = arith.cmpi slt, %1, %c0_i32_2 : i32
    %6 = arith.xori %4, %5 : i1
    %7 = arith.andi %6, %3 : i1
    %8 = arith.addi %2, %1 : i32
    %9 = arith.select %7, %8, %2 : i32
    %c0_i32_3 = arith.constant 0 : i32
    %10 = arith.cmpi eq, %arg1, %c0_i32_3 : i32
    %11 = arith.extui %10 : i1 to i32
    %c0_i32_4 = arith.constant 0 : i32
    %12 = arith.cmpi ne, %11, %c0_i32_4 : i32
    scf.if %12 {
      %c0_i32_63 = arith.constant 0 : i32
      %c0_i32_64 = arith.constant 0 : i32
      %c0_i32_65 = arith.constant 0 : i32
      %c0_i32_66 = arith.constant 0 : i32
      %c0_i32_67 = arith.constant 0 : i32
      %94 = tpu.memref_slice %arg2[%arg0, %c0_i32_65, %c0_i32_66, %c0_i32_67] : memref<2x18x24x128xbf16, #tpu.memory_space<any>> -> memref<1x10x24x128xbf16, #tpu.memory_space<any>>
      %95 = tpu.memref_squeeze %94 : memref<1x10x24x128xbf16, #tpu.memory_space<any>> -> memref<10x24x128xbf16, #tpu.memory_space<any>>
      %c0_i32_68 = arith.constant 0 : i32
      %c0_i32_69 = arith.constant 0 : i32
      %c0_i32_70 = arith.constant 0 : i32
      %96 = tpu.memref_slice %arg6[%c0_i32_63, %c0_i32_68, %c0_i32_69, %c0_i32_70] : memref<2x10x24x128xbf16, #tpu.memory_space<vmem>> -> memref<1x10x24x128xbf16, #tpu.memory_space<vmem>>
      %97 = tpu.memref_squeeze %96 : memref<1x10x24x128xbf16, #tpu.memory_space<vmem>> -> memref<10x24x128xbf16, #tpu.memory_space<vmem>>
      %98 = tpu.memref_slice %arg7[%c0_i32_64] : memref<2x!tpu.dma_semaphore, #tpu.memory_space<semaphore_mem>> -> memref<1x!tpu.dma_semaphore, #tpu.memory_space<semaphore_mem>>
      %99 = tpu.memref_squeeze %98 : memref<1x!tpu.dma_semaphore, #tpu.memory_space<semaphore_mem>> -> memref<!tpu.dma_semaphore, #tpu.memory_space<semaphore_mem>>
      tpu.enqueue_dma source(%95 : memref<10x24x128xbf16, #tpu.memory_space<any>>) target(%97 : memref<10x24x128xbf16, #tpu.memory_space<vmem>>) target_semaphore(%99 : memref<!tpu.dma_semaphore, #tpu.memory_space<semaphore_mem>>)
    } else {
    }
    %c0_i32_5 = arith.constant 0 : i32
    %c0_i32_6 = arith.constant 0 : i32
    %c0_i32_7 = arith.constant 0 : i32
    %13 = tpu.memref_slice %arg2[%arg0, %c0_i32_5, %c0_i32_6, %c0_i32_7] : memref<2x18x24x128xbf16, #tpu.memory_space<any>> -> memref<1x10x24x128xbf16, #tpu.memory_space<any>>
    %14 = tpu.memref_squeeze %13 : memref<1x10x24x128xbf16, #tpu.memory_space<any>> -> memref<10x24x128xbf16, #tpu.memory_space<any>>
    %c0_i32_8 = arith.constant 0 : i32
    %c0_i32_9 = arith.constant 0 : i32
    %c0_i32_10 = arith.constant 0 : i32
    %15 = tpu.memref_slice %arg6[%9, %c0_i32_8, %c0_i32_9, %c0_i32_10] : memref<2x10x24x128xbf16, #tpu.memory_space<vmem>> -> memref<1x10x24x128xbf16, #tpu.memory_space<vmem>>
    %16 = tpu.memref_squeeze %15 : memref<1x10x24x128xbf16, #tpu.memory_space<vmem>> -> memref<10x24x128xbf16, #tpu.memory_space<vmem>>
    %17 = tpu.memref_slice %arg7[%9] : memref<2x!tpu.dma_semaphore, #tpu.memory_space<semaphore_mem>> -> memref<1x!tpu.dma_semaphore, #tpu.memory_space<semaphore_mem>>
    %18 = tpu.memref_squeeze %17 : memref<1x!tpu.dma_semaphore, #tpu.memory_space<semaphore_mem>> -> memref<!tpu.dma_semaphore, #tpu.memory_space<semaphore_mem>>
    tpu.wait_dma2 semaphore(%18 : memref<!tpu.dma_semaphore, #tpu.memory_space<semaphore_mem>>) src(%14 : memref<10x24x128xbf16, #tpu.memory_space<any>>) dst(%16 : memref<10x24x128xbf16, #tpu.memory_space<vmem>>)
    %c1_i32_11 = arith.constant 1 : i32
    %19 = arith.addi %arg1, %c1_i32_11 : i32
    %c2_i32_12 = arith.constant 2 : i32
    %20 = arith.cmpi slt, %19, %c2_i32_12 : i32
    %21 = arith.extui %20 : i1 to i32
    %c0_i32_13 = arith.constant 0 : i32
    %22 = arith.cmpi ne, %21, %c0_i32_13 : i32
    scf.if %22 {
      %c1_i32_63 = arith.constant 1 : i32
      %94 = arith.addi %arg1, %c1_i32_63 : i32
      %c1_i32_64 = arith.constant 1 : i32
      %95 = arith.subi %c1_i32_64, %9 : i32
      %c8_i32 = arith.constant 8 : i32
      %96 = arith.muli %94, %c8_i32 : i32
      %97 = tpu.assume_multiple %96, 8 : i32
      %c0_i32_65 = arith.constant 0 : i32
      %c0_i32_66 = arith.constant 0 : i32
      %98 = tpu.memref_slice %arg2[%arg0, %97, %c0_i32_65, %c0_i32_66] : memref<2x18x24x128xbf16, #tpu.memory_space<any>> -> memref<1x10x24x128xbf16, #tpu.memory_space<any>>
      %99 = tpu.memref_squeeze %98 : memref<1x10x24x128xbf16, #tpu.memory_space<any>> -> memref<10x24x128xbf16, #tpu.memory_space<any>>
      %c0_i32_67 = arith.constant 0 : i32
      %c0_i32_68 = arith.constant 0 : i32
      %c0_i32_69 = arith.constant 0 : i32
      %100 = tpu.memref_slice %arg6[%95, %c0_i32_67, %c0_i32_68, %c0_i32_69] : memref<2x10x24x128xbf16, #tpu.memory_space<vmem>> -> memref<1x10x24x128xbf16, #tpu.memory_space<vmem>>
      %101 = tpu.memref_squeeze %100 : memref<1x10x24x128xbf16, #tpu.memory_space<vmem>> -> memref<10x24x128xbf16, #tpu.memory_space<vmem>>
      %102 = tpu.memref_slice %arg7[%95] : memref<2x!tpu.dma_semaphore, #tpu.memory_space<semaphore_mem>> -> memref<1x!tpu.dma_semaphore, #tpu.memory_space<semaphore_mem>>
      %103 = tpu.memref_squeeze %102 : memref<1x!tpu.dma_semaphore, #tpu.memory_space<semaphore_mem>> -> memref<!tpu.dma_semaphore, #tpu.memory_space<semaphore_mem>>
      tpu.enqueue_dma source(%99 : memref<10x24x128xbf16, #tpu.memory_space<any>>) target(%101 : memref<10x24x128xbf16, #tpu.memory_space<vmem>>) target_semaphore(%103 : memref<!tpu.dma_semaphore, #tpu.memory_space<semaphore_mem>>)
    } else {
    }
    %23 = arith.index_cast %9 : i32 to index
    %c0 = arith.constant 0 : index
    %c0_14 = arith.constant 0 : index
    %c0_15 = arith.constant 0 : index
    %24 = vector.load %arg6[%23, %c0, %c0_14, %c0_15] : memref<2x10x24x128xbf16, #tpu.memory_space<vmem>>, vector<1x8x16x128xbf16>
    %25 = vector.shape_cast %24 : vector<1x8x16x128xbf16> to vector<8x16x128xbf16>
    %26 = vector.shape_cast %25 : vector<8x16x128xbf16> to vector<128x128xbf16>
    %c0_16 = arith.constant 0 : index
    %c0_17 = arith.constant 0 : index
    %27 = vector.load %arg3[%c0_16, %c0_17] : memref<1152x128xbf16, #tpu.memory_space<vmem>>, vector<128x128xbf16>
    %cst = arith.constant dense<0.000000e+00> : vector<128x128xf32>
    %28 = tpu.matmul %26, %27, %cst {dimension_numbers = #tpu.dot_dimension_numbers<[1], [0], [0], [1], [0, 0, 1, 1], [], []>} : vector<128x128xbf16>, vector<128x128xbf16>, vector<128x128xf32> -> vector<128x128xf32>
    %29 = arith.index_cast %9 : i32 to index
    %c0_18 = arith.constant 0 : index
    %c1 = arith.constant 1 : index
    %c0_19 = arith.constant 0 : index
    %30 = vector.load %arg6[%29, %c0_18, %c1, %c0_19] : memref<2x10x24x128xbf16, #tpu.memory_space<vmem>>, vector<1x8x16x128xbf16>
    %31 = vector.shape_cast %30 : vector<1x8x16x128xbf16> to vector<8x16x128xbf16>
    %32 = vector.shape_cast %31 : vector<8x16x128xbf16> to vector<128x128xbf16>
    %c128 = arith.constant 128 : index
    %c0_20 = arith.constant 0 : index
    %33 = vector.load %arg3[%c128, %c0_20] : memref<1152x128xbf16, #tpu.memory_space<vmem>>, vector<128x128xbf16>
    %cst_21 = arith.constant dense<0.000000e+00> : vector<128x128xf32>
    %34 = tpu.matmul %32, %33, %cst_21 {dimension_numbers = #tpu.dot_dimension_numbers<[1], [0], [0], [1], [0, 0, 1, 1], [], []>} : vector<128x128xbf16>, vector<128x128xbf16>, vector<128x128xf32> -> vector<128x128xf32>
    %35 = arith.addf %28, %34 : vector<128x128xf32>
    %36 = arith.index_cast %9 : i32 to index
    %c0_22 = arith.constant 0 : index
    %c2 = arith.constant 2 : index
    %c0_23 = arith.constant 0 : index
    %37 = vector.load %arg6[%36, %c0_22, %c2, %c0_23] : memref<2x10x24x128xbf16, #tpu.memory_space<vmem>>, vector<1x8x16x128xbf16>
    %38 = vector.shape_cast %37 : vector<1x8x16x128xbf16> to vector<8x16x128xbf16>
    %39 = vector.shape_cast %38 : vector<8x16x128xbf16> to vector<128x128xbf16>
    %c256 = arith.constant 256 : index
    %c0_24 = arith.constant 0 : index
    %40 = vector.load %arg3[%c256, %c0_24] : memref<1152x128xbf16, #tpu.memory_space<vmem>>, vector<128x128xbf16>
    %cst_25 = arith.constant dense<0.000000e+00> : vector<128x128xf32>
    %41 = tpu.matmul %39, %40, %cst_25 {dimension_numbers = #tpu.dot_dimension_numbers<[1], [0], [0], [1], [0, 0, 1, 1], [], []>} : vector<128x128xbf16>, vector<128x128xbf16>, vector<128x128xf32> -> vector<128x128xf32>
    %42 = arith.addf %35, %41 : vector<128x128xf32>
    %43 = arith.index_cast %9 : i32 to index
    %c1_26 = arith.constant 1 : index
    %c0_27 = arith.constant 0 : index
    %c0_28 = arith.constant 0 : index
    %44 = vector.load %arg6[%43, %c1_26, %c0_27, %c0_28] : memref<2x10x24x128xbf16, #tpu.memory_space<vmem>>, vector<1x8x16x128xbf16>
    %45 = vector.shape_cast %44 : vector<1x8x16x128xbf16> to vector<8x16x128xbf16>
    %46 = vector.shape_cast %45 : vector<8x16x128xbf16> to vector<128x128xbf16>
    %c384 = arith.constant 384 : index
    %c0_29 = arith.constant 0 : index
    %47 = vector.load %arg3[%c384, %c0_29] : memref<1152x128xbf16, #tpu.memory_space<vmem>>, vector<128x128xbf16>
    %cst_30 = arith.constant dense<0.000000e+00> : vector<128x128xf32>
    %48 = tpu.matmul %46, %47, %cst_30 {dimension_numbers = #tpu.dot_dimension_numbers<[1], [0], [0], [1], [0, 0, 1, 1], [], []>} : vector<128x128xbf16>, vector<128x128xbf16>, vector<128x128xf32> -> vector<128x128xf32>
    %49 = arith.addf %42, %48 : vector<128x128xf32>
    %50 = arith.index_cast %9 : i32 to index
    %c1_31 = arith.constant 1 : index
    %c1_32 = arith.constant 1 : index
    %c0_33 = arith.constant 0 : index
    %51 = vector.load %arg6[%50, %c1_31, %c1_32, %c0_33] : memref<2x10x24x128xbf16, #tpu.memory_space<vmem>>, vector<1x8x16x128xbf16>
    %52 = vector.shape_cast %51 : vector<1x8x16x128xbf16> to vector<8x16x128xbf16>
    %53 = vector.shape_cast %52 : vector<8x16x128xbf16> to vector<128x128xbf16>
    %c512 = arith.constant 512 : index
    %c0_34 = arith.constant 0 : index
    %54 = vector.load %arg3[%c512, %c0_34] : memref<1152x128xbf16, #tpu.memory_space<vmem>>, vector<128x128xbf16>
    %cst_35 = arith.constant dense<0.000000e+00> : vector<128x128xf32>
    %55 = tpu.matmul %53, %54, %cst_35 {dimension_numbers = #tpu.dot_dimension_numbers<[1], [0], [0], [1], [0, 0, 1, 1], [], []>} : vector<128x128xbf16>, vector<128x128xbf16>, vector<128x128xf32> -> vector<128x128xf32>
    %56 = arith.addf %49, %55 : vector<128x128xf32>
    %57 = arith.index_cast %9 : i32 to index
    %c1_36 = arith.constant 1 : index
    %c2_37 = arith.constant 2 : index
    %c0_38 = arith.constant 0 : index
    %58 = vector.load %arg6[%57, %c1_36, %c2_37, %c0_38] : memref<2x10x24x128xbf16, #tpu.memory_space<vmem>>, vector<1x8x16x128xbf16>
    %59 = vector.shape_cast %58 : vector<1x8x16x128xbf16> to vector<8x16x128xbf16>
    %60 = vector.shape_cast %59 : vector<8x16x128xbf16> to vector<128x128xbf16>
    %c640 = arith.constant 640 : index
    %c0_39 = arith.constant 0 : index
    %61 = vector.load %arg3[%c640, %c0_39] : memref<1152x128xbf16, #tpu.memory_space<vmem>>, vector<128x128xbf16>
    %cst_40 = arith.constant dense<0.000000e+00> : vector<128x128xf32>
    %62 = tpu.matmul %60, %61, %cst_40 {dimension_numbers = #tpu.dot_dimension_numbers<[1], [0], [0], [1], [0, 0, 1, 1], [], []>} : vector<128x128xbf16>, vector<128x128xbf16>, vector<128x128xf32> -> vector<128x128xf32>
    %63 = arith.addf %56, %62 : vector<128x128xf32>
    %64 = arith.index_cast %9 : i32 to index
    %c2_41 = arith.constant 2 : index
    %c0_42 = arith.constant 0 : index
    %c0_43 = arith.constant 0 : index
    %65 = vector.load %arg6[%64, %c2_41, %c0_42, %c0_43] : memref<2x10x24x128xbf16, #tpu.memory_space<vmem>>, vector<1x8x16x128xbf16>
    %66 = vector.shape_cast %65 : vector<1x8x16x128xbf16> to vector<8x16x128xbf16>
    %67 = vector.shape_cast %66 : vector<8x16x128xbf16> to vector<128x128xbf16>
    %c768 = arith.constant 768 : index
    %c0_44 = arith.constant 0 : index
    %68 = vector.load %arg3[%c768, %c0_44] : memref<1152x128xbf16, #tpu.memory_space<vmem>>, vector<128x128xbf16>
    %cst_45 = arith.constant dense<0.000000e+00> : vector<128x128xf32>
    %69 = tpu.matmul %67, %68, %cst_45 {dimension_numbers = #tpu.dot_dimension_numbers<[1], [0], [0], [1], [0, 0, 1, 1], [], []>} : vector<128x128xbf16>, vector<128x128xbf16>, vector<128x128xf32> -> vector<128x128xf32>
    %70 = arith.addf %63, %69 : vector<128x128xf32>
    %71 = arith.index_cast %9 : i32 to index
    %c2_46 = arith.constant 2 : index
    %c1_47 = arith.constant 1 : index
    %c0_48 = arith.constant 0 : index
    %72 = vector.load %arg6[%71, %c2_46, %c1_47, %c0_48] : memref<2x10x24x128xbf16, #tpu.memory_space<vmem>>, vector<1x8x16x128xbf16>
    %73 = vector.shape_cast %72 : vector<1x8x16x128xbf16> to vector<8x16x128xbf16>
    %74 = vector.shape_cast %73 : vector<8x16x128xbf16> to vector<128x128xbf16>
    %c896 = arith.constant 896 : index
    %c0_49 = arith.constant 0 : index
    %75 = vector.load %arg3[%c896, %c0_49] : memref<1152x128xbf16, #tpu.memory_space<vmem>>, vector<128x128xbf16>
    %cst_50 = arith.constant dense<0.000000e+00> : vector<128x128xf32>
    %76 = tpu.matmul %74, %75, %cst_50 {dimension_numbers = #tpu.dot_dimension_numbers<[1], [0], [0], [1], [0, 0, 1, 1], [], []>} : vector<128x128xbf16>, vector<128x128xbf16>, vector<128x128xf32> -> vector<128x128xf32>
    %77 = arith.addf %70, %76 : vector<128x128xf32>
    %78 = arith.index_cast %9 : i32 to index
    %c2_51 = arith.constant 2 : index
    %c2_52 = arith.constant 2 : index
    %c0_53 = arith.constant 0 : index
    %79 = vector.load %arg6[%78, %c2_51, %c2_52, %c0_53] : memref<2x10x24x128xbf16, #tpu.memory_space<vmem>>, vector<1x8x16x128xbf16>
    %80 = vector.shape_cast %79 : vector<1x8x16x128xbf16> to vector<8x16x128xbf16>
    %81 = vector.shape_cast %80 : vector<8x16x128xbf16> to vector<128x128xbf16>
    %c1024 = arith.constant 1024 : index
    %c0_54 = arith.constant 0 : index
    %82 = vector.load %arg3[%c1024, %c0_54] : memref<1152x128xbf16, #tpu.memory_space<vmem>>, vector<128x128xbf16>
    %cst_55 = arith.constant dense<0.000000e+00> : vector<128x128xf32>
    %83 = tpu.matmul %81, %82, %cst_55 {dimension_numbers = #tpu.dot_dimension_numbers<[1], [0], [0], [1], [0, 0, 1, 1], [], []>} : vector<128x128xbf16>, vector<128x128xbf16>, vector<128x128xf32> -> vector<128x128xf32>
    %84 = arith.addf %77, %83 : vector<128x128xf32>
    %c0_56 = arith.constant 0 : index
    %c0_57 = arith.constant 0 : index
    %85 = vector.load %arg4[%c0_56, %c0_57] : memref<1x128xf32, #tpu.memory_space<vmem>>, vector<1x128xf32>
    %86 = vector.broadcast %85 : vector<1x128xf32> to vector<128x128xf32>
    %87 = arith.addf %84, %86 : vector<128x128xf32>
    %cst_58 = arith.constant 0.000000e+00 : f32
    %88 = vector.broadcast %cst_58 : f32 to vector<128x128xf32>
    %89 = arith.maximumf %87, %88 : vector<128x128xf32>
    %90 = vector.shape_cast %89 : vector<128x128xf32> to vector<8x16x128xf32>
    %c0_59 = arith.constant 0 : index
    %c0_60 = arith.constant 0 : index
    %c0_61 = arith.constant 0 : index
    %c0_62 = arith.constant 0 : index
    %91 = vector.load %arg5[%c0_59, %c0_60, %c0_61, %c0_62] : memref<1x8x16x128xf32, #tpu.memory_space<vmem>>, vector<1x8x16x128xf32>
    %92 = vector.shape_cast %91 : vector<1x8x16x128xf32> to vector<8x16x128xf32>
    %93 = vector.shape_cast %90 : vector<8x16x128xf32> to vector<1x8x16x128xf32>
    tpu.vector_store %arg5[%c0_59, %c0_60, %c0_61, %c0_62], %93 {strides = array<i32>} : memref<1x8x16x128xf32, #tpu.memory_space<vmem>>, vector<1x8x16x128xf32>,
    return
  }
  func.func @transform_1(%arg0: i32, %arg1: i32) -> (i32, i32) {
    %c0_i32 = arith.constant 0 : i32
    %c0_i32_0 = arith.constant 0 : i32
    %c0_i32_1 = arith.constant 0 : i32
    return %c0_i32, %c0_i32_0 : i32, i32
  }
  func.func @transform_2(%arg0: i32, %arg1: i32) -> (i32, i32) {
    %c0_i32 = arith.constant 0 : i32
    %c0_i32_0 = arith.constant 0 : i32
    %c0_i32_1 = arith.constant 0 : i32
    return %c0_i32, %c0_i32_0 : i32, i32
  }
  func.func @transform_3(%arg0: i32, %arg1: i32) -> (i32, i32, i32, i32) {
    %c0_i32 = arith.constant 0 : i32
    %c0_i32_0 = arith.constant 0 : i32
    %c0_i32_1 = arith.constant 0 : i32
    return %arg0, %arg1, %c0_i32, %c0_i32_0 : i32, i32, i32, i32
  }
}

</mosaic_0001>

<llo_original>
// kernel: tpu_custom_call.1
$region0: #{tpu_custom_call.1}
  #allocation0 [shape = 'u32[]', space=smem, size = 0x4, offset = 0x4, fixed_abs, tag = 'smem constant byte address 0x4 - core index']
  #allocation1 [shape = 'u32[144,128]{1,0:T(1,128)}', space=vmem, size = 0x12000, scoped, tag = 'internal scratch']
  #allocation2 [shape = 'bf16[2,10,24,128]{3,2,1,0:T(8,128)(2,1)}', space=vmem, size = 0x1e000, scoped, tag = 'scratch operand']
  #allocation3 [shape = 's32[2]{0}', space=sflag, size = 0x8, scoped, tag = 'scratch operand']
  #allocation8 [shape = 's32[]', space=sflag, size = 0x4, offset = 0, fixed_abs, tag = 'sflag constant byte address 0x0 - dummy sync flag']
  #allocation9 [shape = 's32[]', space=sflag, size = 0x4, offset = 0, fixed_abs, tag = 'sflag constant byte address 0x0 - dummy sync flag']
  #allocation10 [shape = 'u32[]', space=smem, size = 0x4, offset = 0x44, fixed_abs, tag = 'smem constant byte address 0x44 - assertion arg 0']
  #allocation11 [shape = 'u32[]', space=smem, size = 0x4, offset = 0x48, fixed_abs, tag = 'smem constant byte address 0x48 - assertion arg 1']
  #allocation12 [shape = 's32[]', space=sflag, size = 0x4, offset = 0, fixed_abs, tag = 'sflag constant byte address 0x0 - dummy sync flag']
  #allocation13 [shape = 's32[]', space=sflag, size = 0x4, offset = 0, fixed_abs, tag = 'sflag constant byte address 0x0 - dummy sync flag']
  %s0 = inlined_call_operand.hbm [shape: bf16[2,18,24,128], index: 0, kind: input, shape index: {}]
  %s1 = inlined_call_operand.hbm [shape: bf16[1152,128], index: 1, kind: input, shape index: {}]
  %s2 = inlined_call_operand.vmem [shape: f32[1,128], index: 2, kind: input, shape index: {}]
  %s3 = inlined_call_operand.hbm [shape: f32[2,16,16,128], index: 3, kind: output, shape index: {}]
  %s4 = sld [smem:[#allocation0]]
  $region61: #{tpu_custom_call.1} parent=0
    _
  %s6 = ssub.s32 1, %s4
  %s7 = scalar_select 0, %s6, %s4
  $region1: #{tpu_custom_call.1} parent=0
    #allocation4 [shape = 'u8[294912]{0}', space=vmem, size = 0x48000, scoped, tag = 'input window, operand 1, single buffered']
    #allocation5 [shape = 's32[2]{0}', space=sflag, size = 0x8, scoped, tag = 'scoped memory for tpu_custom_call.1']
    #allocation6 [shape = 's32[2]{0}', space=sflag, size = 0x8, scoped, tag = 'scoped memory for tpu_custom_call.1']
    #allocation7 [shape = 'u8[131072]{0}', space=vmem, size = 0x20000, scoped, tag = 'output window, operand 0']
    %8 = vsyncpa [#allocation5], 0
    %9 = vsyncpa [#allocation6], 0
    %s10 = scalar_lea.sflag [#allocation6], 1
    %11 = vsyncpa %s10, 0
    loop: start=0, step=1, limit=6
    $region2: #{tpu_custom_call.1} parent=1 // loop_pre_header
      _
    $region3: #{tpu_custom_call.1} parent=1 // loop_header
      %s13 = sphi 0, %s17
      %p14 = scmp.ge.s32.totalorder %s13, 6
      %s20 = sphi 0, %s32
      %s21 = sphi 0, %s28
      %s22 = sphi 0, %s20
      %s23 = sphi 0, %s21
      %s24 = sphi 0, %s22
      %s25 = sphi 0, %s23
      %s33 = sphi 0, %s33
      %s35 = sphi 0, %s33
      %s36 = sphi 0, %s35
      %s50 = sphi 0, %s36
      %s54 = sphi 0, %s54
      %s56 = sphi 0, %s54
      %s57 = sphi 0, %s56
      %s71 = sphi 0, %s57
      %s79 = sphi 0, %s81
      %s82 = sphi 0, %s79
      %s83 = sphi 0, %s82
      %s99 = sphi 0, %s83
    $region4: #{tpu_custom_call.1} parent=1 // loop_header_branch
      %16 = sbr.rel (%p14) target = $region8
    $region5: #{tpu_custom_call.1} parent=1 // loop_body
      %s18 = ssub.s32 %s13, 1
      %s19 = ssub.s32 %s13, 2
      %s26 = sadd.s32 1, %s21
      %p27 = scmp.ge.s32.totalorder %s26, 2
      %s28 = scalar_select %p27, 0, %s26
      %s29 = sadd.s32 1, %s20
      %s30 = scalar_select %p27, %s29, %s20
      %p31 = scmp.ge.s32.totalorder %s30, 2
      %s32 = scalar_select %p31, 0, %s30
      %s34 = sadd.s32 %s33, 1
      %p37 = scmp.eq.s32.totalorder %s13, 3
      %p38 = scmp.ne.s32.totalorder %s33, %s35
      %p39 = scmp.eq.s32.totalorder %s13, 0
      %p40 = por %p38, %p39
      %p41 = scmp.ne.s32.totalorder %s33, %s35
      %p42 = scmp.eq.s32.totalorder %s18, 3
      %p43 = por %p41, %p42
      %p44 = scmp.ne.s32.totalorder %s35, %s36
      %p45 = scmp.eq.s32.totalorder %s18, 0
      %p46 = por %p44, %p45
      %p47 = scmp.ne.s32.totalorder %s35, %s36
      %p48 = scmp.eq.s32.totalorder %s19, 3
      %p49 = por %p47, %p48
      %p51 = scmp.ne.s32.totalorder %s36, %s50
      %p52 = scmp.eq.s32.totalorder %s19, 0
      %p53 = por %p51, %p52
      %s55 = sadd.s32 %s54, 1
      %p58 = scmp.eq.s32.totalorder %s13, 3
      %p59 = scmp.ne.s32.totalorder %s54, %s56
      %p60 = scmp.eq.s32.totalorder %s13, 0
      %p61 = por %p59, %p60
      %p62 = scmp.ne.s32.totalorder %s54, %s56
      %p63 = scmp.eq.s32.totalorder %s18, 3
      %p64 = por %p62, %p63
      %p65 = scmp.ne.s32.totalorder %s56, %s57
      %p66 = scmp.eq.s32.totalorder %s18, 0
      %p67 = por %p65, %p66
      %p68 = scmp.ne.s32.totalorder %s56, %s57
      %p69 = scmp.eq.s32.totalorder %s19, 3
      %p70 = por %p68, %p69
      %p72 = scmp.ne.s32.totalorder %s57, %s71
      %p73 = scmp.eq.s32.totalorder %s19, 0
      %p74 = por %p72, %p73
      %s75 = ssub.s32 %s20, %s32
      %s76 = ssub.s32 %s21, %s28
      %s77 = sor.u32 %s75, %s76
      %p78 = scmp.eq.s32.totalorder %s77, 0
      %s80 = sadd.s32 %s79, 1
      %s81 = scalar_select %p78, %s79, %s80
      %p84 = pneg %p78
      %p85 = scmp.eq.s32.totalorder %s13, 3
      %p86 = por %p84, %p85
      %p87 = scmp.ne.s32.totalorder %s79, %s82
      %p88 = scmp.eq.s32.totalorder %s13, 0
      %p89 = por %p87, %p88
      %p90 = scmp.ne.s32.totalorder %s79, %s82
      %p91 = scmp.eq.s32.totalorder %s18, 3
      %p92 = por %p90, %p91
      %p93 = scmp.ne.s32.totalorder %s82, %s83
      %p94 = scmp.eq.s32.totalorder %s18, 0
      %p95 = por %p93, %p94
      %p96 = scmp.ne.s32.totalorder %s82, %s83
      %p97 = scmp.eq.s32.totalorder %s19, 3
      %p98 = por %p96, %p97
      %p100 = scmp.ne.s32.totalorder %s83, %s99
      %p101 = scmp.eq.s32.totalorder %s19, 0
      %p102 = por %p100, %p101
      %p103 = scmp.le.s32.totalorder 1, %s13
      %p104 = scmp.lt.s32.totalorder %s13, 5
      %p105 = pnand %p103, %p104
      %p106 = pneg %p105
      // Predicated region
      $region9: #{tpu_custom_call.1} parent=5 // pred_check
        _
      $region10: #{tpu_custom_call.1} parent=5 // pred_check_branch
        %108 = sbr.rel (%p105) target = $region12
      $region11: #{tpu_custom_call.1} parent=5 // pred_region
        %s109 = ssub.s32 %s13, 1
        // Predicated region
        $region13: #{tpu_custom_call.1} parent=11 // pred_check
          %p110 = pneg %p46
        $region14: #{tpu_custom_call.1} parent=11 // pred_check_branch
          %112 = sbr.rel (%p110) target = $region16
        $region15: #{tpu_custom_call.1} parent=11 // pred_region
          %s114 = ssub.s32 9216, 9216
          %115 = vsyncadd [#allocation5], %s114
          %s116 = sshll.u32 [#allocation4], 4
          %s117 = int_to_ptr.vmem [resolvable:$true] %s116
          %122 = dma.hbm_to_vmem [thread:$0]  %s1, 9216, %s117, [#allocation5], 64, 64, 4
        $region16: #{tpu_custom_call.1} parent=11 // pred_fallthru
          _
        // Predicated region
        $region17: #{tpu_custom_call.1} parent=11 // pred_check
          %p123 = pneg %p67
        $region18: #{tpu_custom_call.1} parent=11 // pred_check_branch
          %125 = sbr.rel (%p123) target = $region20
        $region19: #{tpu_custom_call.1} parent=11 // pred_region
          _
        $region20: #{tpu_custom_call.1} parent=11 // pred_fallthru
          _
      $region12: #{tpu_custom_call.1} parent=5 // pred_fallthru
        _
      %p126 = scmp.lt.s32.totalorder %s13, 4
      // Predicated region
      $region21: #{tpu_custom_call.1} parent=5 // pred_check
        %p127 = pneg %p126
      $region22: #{tpu_custom_call.1} parent=5 // pred_check_branch
        %129 = sbr.rel (%p127) target = $region24
      $region23: #{tpu_custom_call.1} parent=5 // pred_region
        _
      $region24: #{tpu_custom_call.1} parent=5 // pred_fallthru
        _
      %p130 = scmp.le.s32.totalorder 1, %s13
      %p131 = scmp.lt.s32.totalorder %s13, 5
      %p132 = pnand %p130, %p131
      %p133 = pneg %p132
      // Predicated region
      $region25: #{tpu_custom_call.1} parent=5 // pred_check
        _
      $region26: #{tpu_custom_call.1} parent=5 // pred_check_branch
        %135 = sbr.rel (%p132) target = $region28
      $region27: #{tpu_custom_call.1} parent=5 // pred_region
        %s136 = ssub.s32 %s13, 1
        // Predicated region
        $region29: #{tpu_custom_call.1} parent=27 // pred_check
          %p137 = pneg %p46
        $region30: #{tpu_custom_call.1} parent=27 // pred_check_branch
          %139 = sbr.rel (%p137) target = $region32
        $region31: #{tpu_custom_call.1} parent=27 // pred_region
          %140 = dma.done [#allocation5], 9216
        $region32: #{tpu_custom_call.1} parent=27 // pred_fallthru
          _
        %p141 = pneg %p46
        %p142 = pneg %p43
        %p143 = pneg %p67
        %p144 = pneg %p64
        %p145 = pneg %p95
        %p146 = pneg %p92
        %s147 = sand.u32 %s82, 1
        %s148 = scalar_lea.sflag [#allocation6], %s147
        %s149 = sand.u32 %s82, 1
        %s150 = smul.addr %s149, 128
        %s151 = scalar_lea.vmem [#allocation7], %s150
        %s152 = smul.u32 8, %s23
        %p154 = scmp.lt.s32.totalorder %s23, 0
        %s155 = ssub.s32 0, %s23
        %s156 = scalar_select %p154, %s155, %s23
        %s157 = sand.u32 %s156, 1
        %s158 = ssub.s32 0, %s157
        %s159 = scalar_select %p154, %s158, %s157
        %p160 = scmp.ne.s32.totalorder %s159, 0
        %p161 = scmp.lt.s32.totalorder %s159, 0
        %p162 = pnand %p161, %p160
        %p163 = pneg %p162
        %s164 = sadd.s32 %s159, 2
        %s165 = scalar_select %p163, %s164, %s159
        %p166 = scmp.eq.s32.totalorder %s23, 0
        // Predicated region
        $region33: #{tpu_custom_call.1} parent=27 // pred_check
          %p167 = pneg %p166
        $region34: #{tpu_custom_call.1} parent=27 // pred_check_branch
          %169 = sbr.rel (%p167) target = $region36
        $region35: #{tpu_custom_call.1} parent=27 // pred_region
          %s170 = smul.u32 %s22, 54
          %s171 = smul.addr %s170, 64
          %s172 = scalar_lea.hbm %s0, %s171
          // Predicated region
          $region37: #{tpu_custom_call.1} parent=35 // pred_check
            _
          $region38: #{tpu_custom_call.1} parent=35 // pred_check_branch
            %174 = sbr.rel target = $region40
          $region39: #{tpu_custom_call.1} parent=35 // pred_region
            %175 = sst [smem:[#allocation10]] [#allocation9]
            %176 = sst [smem:[#allocation11]] [#allocation8]
          $region40: #{tpu_custom_call.1} parent=35 // pred_fallthru
            _
          %178 = shalt.err (0)
          %s180 = sshll.u32 [#allocation2], 4
          %s181 = int_to_ptr.vmem [resolvable:$true] %s180
          %183 = dma.hbm_to_vmem [thread:$0]  %s172, 1920, %s181, [#allocation3]
        $region36: #{tpu_custom_call.1} parent=27 // pred_fallthru
          _
        %s184 = scalar_lea.sflag [#allocation3], %s165
        %s185 = smul.u32 4, 10
        %s186 = smul.u32 %s185, 3
        %s187 = smul.u32 %s186, 1
        %s188 = sshll.u32 %s187, 4
        %189 = dma.done %s184, %s188
        %s190 = sadd.s32 %s23, 1
        %p191 = scmp.lt.s32.totalorder %s190, 2
        // Predicated region
        $region41: #{tpu_custom_call.1} parent=27 // pred_check
          %p192 = pneg %p191
        $region42: #{tpu_custom_call.1} parent=27 // pred_check_branch
          %194 = sbr.rel (%p192) target = $region44
        $region43: #{tpu_custom_call.1} parent=27 // pred_region
          %s195 = ssub.s32 1, %s165
          %s196 = smul.u32 %s190, 8
          %s197 = smul.u32 %s196, 3
          %s198 = smul.u32 %s22, 54
          %s199 = sadd.s32 %s197, %s198
          %s200 = smul.addr %s199, 64
          %s201 = scalar_lea.hbm %s0, %s200
          %s202 = smul.u32 %s195, 30
          %s203 = smul.addr %s202, 4
          %s204 = scalar_lea.vmem [#allocation2], %s203
          %s205 = scalar_lea.sflag [#allocation3], %s195
          // Predicated region
          $region45: #{tpu_custom_call.1} parent=43 // pred_check
            _
          $region46: #{tpu_custom_call.1} parent=43 // pred_check_branch
            %207 = sbr.rel target = $region48
          $region47: #{tpu_custom_call.1} parent=43 // pred_region
            %208 = sst [smem:[#allocation10]] [#allocation13]
            %209 = sst [smem:[#allocation11]] [#allocation12]
          $region48: #{tpu_custom_call.1} parent=43 // pred_fallthru
            _
          %211 = shalt.err (0)
          %s213 = sshll.u32 %s204, 4
          %s214 = int_to_ptr.vmem [resolvable:$true] %s213
          %216 = dma.hbm_to_vmem [thread:$0]  %s201, 1920, %s214, %s205
        $region44: #{tpu_custom_call.1} parent=27 // pred_fallthru
          _
        %s217 = smul.u32 %s165, 30
        %s218 = smul.addr %s217, 4
        %s219 = scalar_lea.vmem [#allocation2], %s218
        %v220 = vld [vmem:[%s219] sm:$0xf]
        %v221 = vld [vmem:[%s219 + $0x4] sm:$0xf]
        %v222 = vld [vmem:[%s219 + $0xc] sm:$0xf]
        %v223 = vld [vmem:[%s219 + $0x10] sm:$0xf]
        %v224 = vld [vmem:[%s219 + $0x18] sm:$0xf]
        %v225 = vld [vmem:[%s219 + $0x1c] sm:$0xf]
        %v226 = vld [vmem:[%s219 + $0x24] sm:$0xf]
        %v227 = vld [vmem:[%s219 + $0x28] sm:$0xf]
        %v228 = vld [vmem:[%s219 + $0x30] sm:$0xf]
        %v229 = vld [vmem:[%s219 + $0x34] sm:$0xf]
        %v230 = vld [vmem:[%s219 + $0x3c] sm:$0xf]
        %v231 = vld [vmem:[%s219 + $0x40] sm:$0xf]
        %v232 = vld [vmem:[%s219 + $0x48] sm:$0xf]
        %v233 = vld [vmem:[%s219 + $0x4c] sm:$0xf]
        %v234 = vld [vmem:[%s219 + $0x54] sm:$0xf]
        %v235 = vld [vmem:[%s219 + $0x58] sm:$0xf]
        %v236 = vld [vmem:[#allocation4] sm:$0xf]
        %v237 = vld [vmem:[#allocation4 + $0x4] sm:$0xf]
        %v238 = vld [vmem:[#allocation4 + $0x8] sm:$0xf]
        %v239 = vld [vmem:[#allocation4 + $0xc] sm:$0xf]
        %v240 = vld [vmem:[#allocation4 + $0x10] sm:$0xf]
        %v241 = vld [vmem:[#allocation4 + $0x14] sm:$0xf]
        %v242 = vld [vmem:[#allocation4 + $0x18] sm:$0xf]
        %v243 = vld [vmem:[#allocation4 + $0x1c] sm:$0xf]
        %v244 = vld [vmem:[#allocation4 + $0x20] sm:$0xf]
        %v245 = vld [vmem:[#allocation4 + $0x24] sm:$0xf]
        %v246 = vld [vmem:[#allocation4 + $0x28] sm:$0xf]
        %v247 = vld [vmem:[#allocation4 + $0x2c] sm:$0xf]
        %v248 = vld [vmem:[#allocation4 + $0x30] sm:$0xf]
        %v249 = vld [vmem:[#allocation4 + $0x34] sm:$0xf]
        %v250 = vld [vmem:[#allocation4 + $0x38] sm:$0xf]
        %v251 = vld [vmem:[#allocation4 + $0x3c] sm:$0xf]
        %v252 = vld [vmem:[%s219 + $0x8] sm:$0x1]
        %v253 = vld [vmem:[%s219 + $0x14] sm:$0x1]
        %v254 = vld [vmem:[%s219 + $0x20] sm:$0x1]
        %v255 = vld [vmem:[%s219 + $0x2c] sm:$0x1]
        %v256 = vld [vmem:[%s219 + $0x38] sm:$0x1]
        %v257 = vld [vmem:[%s219 + $0x44] sm:$0x1]
        %v258 = vld [vmem:[%s219 + $0x50] sm:$0x1]
        %v259 = vld [vmem:[%s219 + $0x5c] sm:$0x1]
        %vm260 = vsmask.f32 3328
        %vm261 = vsmask.f32 7440
        %vm262 = vmor %vm260, %vm261
        %v264 = vshrl.u32 %v220, 16
        %v266 = vrot.slane %v264, 4
        %v267 = vshll.u32 %v220, 16
        %v269 = vrot.slane %v267, 5
        %v270 = vor.u32 %v266, %v269
        %v271 = vrot.slane %v270, 4
        %v273 = vshll.u32 %v221, 16
        %v275 = vrot.slane %v273, 5
        %v276 = vsel %vm262, %v271, %v275
        %v277 = vshrl.u32 %v221, 16
        %v279 = vrot.slane %v277, 4
        %v280 = vor.u32 %v279, %v275
        %v281 = vrot.slane %v280, 4
        %v283 = vshll.u32 %v252, 16
        %v285 = vrot.slane %v283, 5
        %v286 = vsel %vm262, %v281, %v285
        %v288 = vshrl.u32 %v222, 16
        %v290 = vrot.slane %v288, 4
        %v291 = vshll.u32 %v222, 16
        %v293 = vrot.slane %v291, 5
        %v294 = vor.u32 %v290, %v293
        %v295 = vrot.slane %v294, 4
        %v297 = vshll.u32 %v223, 16
        %v299 = vrot.slane %v297, 5
        %v300 = vsel %vm262, %v295, %v299
        %v301 = vshrl.u32 %v223, 16
        %v303 = vrot.slane %v301, 4
        %v304 = vor.u32 %v303, %v299
        %v305 = vrot.slane %v304, 4
        %v307 = vshll.u32 %v253, 16
        %v309 = vrot.slane %v307, 5
        %v310 = vsel %vm262, %v305, %v309
        %v312 = vshrl.u32 %v224, 16
        %v314 = vrot.slane %v312, 4
        %v315 = vshll.u32 %v224, 16
        %v317 = vrot.slane %v315, 5
        %v318 = vor.u32 %v314, %v317
        %v319 = vrot.slane %v318, 4
        %v321 = vshll.u32 %v225, 16
        %v323 = vrot.slane %v321, 5
        %v324 = vsel %vm262, %v319, %v323
        %v325 = vshrl.u32 %v225, 16
        %v327 = vrot.slane %v325, 4
        %v328 = vor.u32 %v327, %v323
        %v329 = vrot.slane %v328, 4
        %v331 = vshll.u32 %v254, 16
        %v333 = vrot.slane %v331, 5
        %v334 = vsel %vm262, %v329, %v333
        %v336 = vshrl.u32 %v226, 16
        %v338 = vrot.slane %v336, 4
        %v339 = vshll.u32 %v226, 16
        %v341 = vrot.slane %v339, 5
        %v342 = vor.u32 %v338, %v341
        %v343 = vrot.slane %v342, 4
        %v345 = vshll.u32 %v227, 16
        %v347 = vrot.slane %v345, 5
        %v348 = vsel %vm262, %v343, %v347
        %v349 = vshrl.u32 %v227, 16
        %v351 = vrot.slane %v349, 4
        %v352 = vor.u32 %v351, %v347
        %v353 = vrot.slane %v352, 4
        %v355 = vshll.u32 %v255, 16
        %v357 = vrot.slane %v355, 5
        %v358 = vsel %vm262, %v353, %v357
        %v360 = vshrl.u32 %v228, 16
        %v362 = vrot.slane %v360, 4
        %v363 = vshll.u32 %v228, 16
        %v365 = vrot.slane %v363, 5
        %v366 = vor.u32 %v362, %v365
        %v367 = vrot.slane %v366, 4
        %v369 = vshll.u32 %v229, 16
        %v371 = vrot.slane %v369, 5
        %v372 = vsel %vm262, %v367, %v371
        %v373 = vshrl.u32 %v229, 16
        %v375 = vrot.slane %v373, 4
        %v376 = vor.u32 %v375, %v371
        %v377 = vrot.slane %v376, 4
        %v379 = vshll.u32 %v256, 16
        %v381 = vrot.slane %v379, 5
        %v382 = vsel %vm262, %v377, %v381
        %v384 = vshrl.u32 %v230, 16
        %v386 = vrot.slane %v384, 4
        %v387 = vshll.u32 %v230, 16
        %v389 = vrot.slane %v387, 5
        %v390 = vor.u32 %v386, %v389
        %v391 = vrot.slane %v390, 4
        %v393 = vshll.u32 %v231, 16
        %v395 = vrot.slane %v393, 5
        %v396 = vsel %vm262, %v391, %v395
        %v397 = vshrl.u32 %v231, 16
        %v399 = vrot.slane %v397, 4
        %v400 = vor.u32 %v399, %v395
        %v401 = vrot.slane %v400, 4
        %v403 = vshll.u32 %v257, 16
        %v405 = vrot.slane %v403, 5
        %v406 = vsel %vm262, %v401, %v405
        %v408 = vshrl.u32 %v232, 16
        %v410 = vrot.slane %v408, 4
        %v411 = vshll.u32 %v232, 16
        %v413 = vrot.slane %v411, 5
        %v414 = vor.u32 %v410, %v413
        %v415 = vrot.slane %v414, 4
        %v417 = vshll.u32 %v233, 16
        %v419 = vrot.slane %v417, 5
        %v420 = vsel %vm262, %v415, %v419
        %v421 = vshrl.u32 %v233, 16
        %v423 = vrot.slane %v421, 4
        %v424 = vor.u32 %v423, %v419
        %v425 = vrot.slane %v424, 4
        %v427 = vshll.u32 %v258, 16
        %v429 = vrot.slane %v427, 5
        %v430 = vsel %vm262, %v425, %v429
        %v432 = vshrl.u32 %v234, 16
        %v434 = vrot.slane %v432, 4
        %v435 = vshll.u32 %v234, 16
        %v437 = vrot.slane %v435, 5
        %v438 = vor.u32 %v434, %v437
        %v439 = vrot.slane %v438, 4
        %v441 = vshll.u32 %v235, 16
        %v443 = vrot.slane %v441, 5
        %v444 = vsel %vm262, %v439, %v443
        %v445 = vshrl.u32 %v235, 16
        %v447 = vrot.slane %v445, 4
        %v448 = vor.u32 %v447, %v443
        %v449 = vrot.slane %v448, 4
        %v451 = vshll.u32 %v259, 16
        %v453 = vrot.slane %v451, 5
        %v454 = vsel %vm262, %v449, %v453
        %v455 = vld [vmem:[#allocation4 + $0x40] sm:$0xf]
        %v456 = vld [vmem:[#allocation4 + $0x44] sm:$0xf]
        %v457 = vld [vmem:[#allocation4 + $0x48] sm:$0xf]
        %v458 = vld [vmem:[#allocation4 + $0x4c] sm:$0xf]
        %v459 = vld [vmem:[#allocation4 + $0x50] sm:$0xf]
        %v460 = vld [vmem:[#allocation4 + $0x54] sm:$0xf]
        %v461 = vld [vmem:[#allocation4 + $0x58] sm:$0xf]
        %v462 = vld [vmem:[#allocation4 + $0x5c] sm:$0xf]
        %v463 = vld [vmem:[#allocation4 + $0x60] sm:$0xf]
        %v464 = vld [vmem:[#allocation4 + $0x64] sm:$0xf]
        %v465 = vld [vmem:[#allocation4 + $0x68] sm:$0xf]
        %v466 = vld [vmem:[#allocation4 + $0x6c] sm:$0xf]
        %v467 = vld [vmem:[#allocation4 + $0x70] sm:$0xf]
        %v468 = vld [vmem:[#allocation4 + $0x74] sm:$0xf]
        %v469 = vld [vmem:[#allocation4 + $0x78] sm:$0xf]
        %v470 = vld [vmem:[#allocation4 + $0x7c] sm:$0xf]
        %v471 = vunpack.c.l.b16 %v276
        %v472 = vunpack.c.l.b16 %v286
        %v473 = vunpack.c.l.b16 %v300
        %v474 = vunpack.c.l.b16 %v310
        %v475 = vunpack.c.l.b16 %v324
        %v476 = vunpack.c.l.b16 %v334
        %v477 = vunpack.c.l.b16 %v348
        %v478 = vunpack.c.l.b16 %v358
        %v479 = vunpack.c.l.b16 %v372
        %v480 = vunpack.c.l.b16 %v382
        %v481 = vunpack.c.l.b16 %v396
        %v482 = vunpack.c.l.b16 %v406
        %v483 = vunpack.c.l.b16 %v420
        %v484 = vunpack.c.l.b16 %v430
        %v485 = vunpack.c.l.b16 %v444
        %v486 = vunpack.c.l.b16 %v454
        %v487 = vpack.c.b16 %v472, %v471
        %v488 = vpack.c.b16 %v474, %v473
        %v489 = vpack.c.b16 %v476, %v475
        %v490 = vpack.c.b16 %v478, %v477
        %v491 = vpack.c.b16 %v480, %v479
        %v492 = vpack.c.b16 %v482, %v481
        %v493 = vpack.c.b16 %v484, %v483
        %v494 = vpack.c.b16 %v486, %v485
        %v519 = vunpack.c.l.b16 %v455
        %v520 = vunpack.c.l.b16 %v456
        %v521 = vunpack.c.l.b16 %v457
        %v522 = vunpack.c.l.b16 %v458
        %v523 = vunpack.c.l.b16 %v459
        %v524 = vunpack.c.l.b16 %v460
        %v525 = vunpack.c.l.b16 %v461
        %v526 = vunpack.c.l.b16 %v462
        %v527 = vunpack.c.l.b16 %v463
        %v528 = vunpack.c.l.b16 %v464
        %v529 = vunpack.c.l.b16 %v465
        %v530 = vunpack.c.l.b16 %v466
        %v531 = vunpack.c.l.b16 %v467
        %v532 = vunpack.c.l.b16 %v468
        %v533 = vunpack.c.l.b16 %v469
        %v534 = vunpack.c.l.b16 %v470
        %v535 = vpack.c.b16 %v520, %v519
        %v536 = vpack.c.b16 %v522, %v521
        %v537 = vpack.c.b16 %v524, %v523
        %v538 = vpack.c.b16 %v526, %v525
        %v539 = vpack.c.b16 %v528, %v527
        %v540 = vpack.c.b16 %v530, %v529
        %v541 = vpack.c.b16 %v532, %v531
        %v542 = vpack.c.b16 %v534, %v533
        %551 = vmatprep.subr.bf16.mxu0 0
        %552 = vmatpush1.bf16.msra.mxu0 %v542
        %553 = vmatprep.subr.bf16.mxu0 0
        %554 = vmatpush1.bf16.msra.mxu0 %v541
        %555 = vmatprep.subr.bf16.mxu0 0
        %556 = vmatpush1.bf16.msra.mxu0 %v540
        %557 = vmatprep.subr.bf16.mxu0 0
        %558 = vmatpush1.bf16.msra.mxu0 %v539
        %559 = vmatprep.subr.bf16.mxu0 0
        %560 = vmatpush1.bf16.msra.mxu0 %v538
        %561 = vmatprep.subr.bf16.mxu0 0
        %562 = vmatpush1.bf16.msra.mxu0 %v537
        %563 = vmatprep.subr.bf16.mxu0 0
        %564 = vmatpush1.bf16.msra.mxu0 %v536
        %565 = vmatprep.subr.bf16.mxu0 0
        %566 = vmatpush1.bf16.msra.mxu0 %v535
        %567 = vmatprep.subr.bf16.mxu0 0
        %568 = vmatpush2.bf16.msra.mxu0 0
        %569 = vmatprep.subr.bf16.mxu0 0
        %570 = vmatpush2.bf16.msra.mxu0 0
        %571 = vmatprep.subr.bf16.mxu0 0
        %572 = vmatpush2.bf16.msra.mxu0 0
        %573 = vmatprep.subr.bf16.mxu0 0
        %574 = vmatpush2.bf16.msra.mxu0 0
        %575 = vmatprep.subr.bf16.mxu0 0
        %576 = vmatpush2.bf16.msra.mxu0 0
        %577 = vmatprep.subr.bf16.mxu0 0
        %578 = vmatpush2.bf16.msra.mxu0 0
        %579 = vmatprep.subr.bf16.mxu0 0
        %580 = vmatpush2.bf16.msra.mxu0 0
        %581 = vmatprep.subr.bf16.mxu0 0
        %582 = vmatpush2.bf16.msra.mxu0 0
        %583 = vmatprep.mubr.bf16.mxu0 0
        %584 = vmatmul.mubr.bf16.gmra.mxu0 %v487
        %v585 = vpop.f32.mrf.mxu0
        %v586 = vadd.f32 0.0, %v585
        %v587 = vpop.f32.mrf.mxu0
        %v588 = vpop.f32.mrf.mxu0
        %v589 = vadd.f32 0.0, %v588
        %v590 = vpop.f32.mrf.mxu0
        %591 = vmatprep.mubr.bf16.mxu0 0
        %592 = vmatmul.mubr.bf16.gmra.mxu0 %v488
        %v593 = vpop.f32.mrf.mxu0
        %v594 = vadd.f32 0.0, %v593
        %v595 = vpop.f32.mrf.mxu0
        %v596 = vpop.f32.mrf.mxu0
        %v597 = vadd.f32 0.0, %v596
        %v598 = vpop.f32.mrf.mxu0
        %599 = vmatprep.mubr.bf16.mxu0 0
        %600 = vmatmul.mubr.bf16.gmra.mxu0 %v489
        %v601 = vpop.f32.mrf.mxu0
        %v602 = vadd.f32 0.0, %v601
        %v603 = vpop.f32.mrf.mxu0
        %v604 = vpop.f32.mrf.mxu0
        %v605 = vadd.f32 0.0, %v604
        %v606 = vpop.f32.mrf.mxu0
        %607 = vmatprep.mubr.bf16.mxu0 0
        %608 = vmatmul.mubr.bf16.gmra.mxu0 %v490
        %v609 = vpop.f32.mrf.mxu0
        %v610 = vadd.f32 0.0, %v609
        %v611 = vpop.f32.mrf.mxu0
        %v612 = vpop.f32.mrf.mxu0
        %v613 = vadd.f32 0.0, %v612
        %v614 = vpop.f32.mrf.mxu0
        %615 = vmatprep.mubr.bf16.mxu0 0
        %616 = vmatmul.mubr.bf16.gmra.mxu0 %v491
        %v617 = vpop.f32.mrf.mxu0
        %v618 = vadd.f32 0.0, %v617
        %v619 = vpop.f32.mrf.mxu0
        %v620 = vpop.f32.mrf.mxu0
        %v621 = vadd.f32 0.0, %v620
        %v622 = vpop.f32.mrf.mxu0
        %623 = vmatprep.mubr.bf16.mxu0 0
        %624 = vmatmul.mubr.bf16.gmra.mxu0 %v492
        %v625 = vpop.f32.mrf.mxu0
        %v626 = vadd.f32 0.0, %v625
        %v627 = vpop.f32.mrf.mxu0
        %v628 = vpop.f32.mrf.mxu0
        %v629 = vadd.f32 0.0, %v628
        %v630 = vpop.f32.mrf.mxu0
        %631 = vmatprep.mubr.bf16.mxu0 0
        %632 = vmatmul.mubr.bf16.gmra.mxu0 %v493
        %v633 = vpop.f32.mrf.mxu0
        %v634 = vadd.f32 0.0, %v633
        %v635 = vpop.f32.mrf.mxu0
        %v636 = vpop.f32.mrf.mxu0
        %v637 = vadd.f32 0.0, %v636
        %v638 = vpop.f32.mrf.mxu0
        %639 = vmatprep.mubr.bf16.mxu0 0
        %640 = vmatmul.mubr.bf16.gmra.mxu0 %v494
        %v641 = vpop.f32.mrf.mxu0
        %v642 = vadd.f32 0.0, %v641
        %v643 = vpop.f32.mrf.mxu0
        %v644 = vpop.f32.mrf.mxu0
        %v645 = vadd.f32 0.0, %v644
        %v646 = vpop.f32.mrf.mxu0
        %647 = vdwg.mxu0
        %v664 = vunpack.c.l.b16 %v220
        %v665 = vunpack.c.l.b16 %v221
        %v666 = vunpack.c.l.b16 %v222
        %v667 = vunpack.c.l.b16 %v223
        %v668 = vunpack.c.l.b16 %v224
        %v669 = vunpack.c.l.b16 %v225
        %v670 = vunpack.c.l.b16 %v226
        %v671 = vunpack.c.l.b16 %v227
        %v672 = vunpack.c.l.b16 %v228
        %v673 = vunpack.c.l.b16 %v229
        %v674 = vunpack.c.l.b16 %v230
        %v675 = vunpack.c.l.b16 %v231
        %v676 = vunpack.c.l.b16 %v232
        %v677 = vunpack.c.l.b16 %v233
        %v678 = vunpack.c.l.b16 %v234
        %v679 = vunpack.c.l.b16 %v235
        %v680 = vpack.c.b16 %v665, %v664
        %v681 = vpack.c.b16 %v667, %v666
        %v682 = vpack.c.b16 %v669, %v668
        %v683 = vpack.c.b16 %v671, %v670
        %v684 = vpack.c.b16 %v673, %v672
        %v685 = vpack.c.b16 %v675, %v674
        %v686 = vpack.c.b16 %v677, %v676
        %v687 = vpack.c.b16 %v679, %v678
        %v712 = vunpack.c.l.b16 %v236
        %v713 = vunpack.c.l.b16 %v237
        %v714 = vunpack.c.l.b16 %v238
        %v715 = vunpack.c.l.b16 %v239
        %v716 = vunpack.c.l.b16 %v240
        %v717 = vunpack.c.l.b16 %v241
        %v718 = vunpack.c.l.b16 %v242
        %v719 = vunpack.c.l.b16 %v243
        %v720 = vunpack.c.l.b16 %v244
        %v721 = vunpack.c.l.b16 %v245
        %v722 = vunpack.c.l.b16 %v246
        %v723 = vunpack.c.l.b16 %v247
        %v724 = vunpack.c.l.b16 %v248
        %v725 = vunpack.c.l.b16 %v249
        %v726 = vunpack.c.l.b16 %v250
        %v727 = vunpack.c.l.b16 %v251
        %v728 = vpack.c.b16 %v713, %v712
        %v729 = vpack.c.b16 %v715, %v714
        %v730 = vpack.c.b16 %v717, %v716
        %v731 = vpack.c.b16 %v719, %v718
        %v732 = vpack.c.b16 %v721, %v720
        %v733 = vpack.c.b16 %v723, %v722
        %v734 = vpack.c.b16 %v725, %v724
        %v735 = vpack.c.b16 %v727, %v726
        %744 = vmatprep.subr.bf16.mxu0 0
        %745 = vmatpush1.bf16.msra.mxu0 %v735
        %746 = vmatprep.subr.bf16.mxu0 0
        %747 = vmatpush1.bf16.msra.mxu0 %v734
        %748 = vmatprep.subr.bf16.mxu0 0
        %749 = vmatpush1.bf16.msra.mxu0 %v733
        %750 = vmatprep.subr.bf16.mxu0 0
        %751 = vmatpush1.bf16.msra.mxu0 %v732
        %752 = vmatprep.subr.bf16.mxu0 0
        %753 = vmatpush1.bf16.msra.mxu0 %v731
        %754 = vmatprep.subr.bf16.mxu0 0
        %755 = vmatpush1.bf16.msra.mxu0 %v730
        %756 = vmatprep.subr.bf16.mxu0 0
        %757 = vmatpush1.bf16.msra.mxu0 %v729
        %758 = vmatprep.subr.bf16.mxu0 0
        %759 = vmatpush1.bf16.msra.mxu0 %v728
        %760 = vmatprep.subr.bf16.mxu0 0
        %761 = vmatpush2.bf16.msra.mxu0 0
        %762 = vmatprep.subr.bf16.mxu0 0
        %763 = vmatpush2.bf16.msra.mxu0 0
        %764 = vmatprep.subr.bf16.mxu0 0
        %765 = vmatpush2.bf16.msra.mxu0 0
        %766 = vmatprep.subr.bf16.mxu0 0
        %767 = vmatpush2.bf16.msra.mxu0 0
        %768 = vmatprep.subr.bf16.mxu0 0
        %769 = vmatpush2.bf16.msra.mxu0 0
        %770 = vmatprep.subr.bf16.mxu0 0
        %771 = vmatpush2.bf16.msra.mxu0 0
        %772 = vmatprep.subr.bf16.mxu0 0
        %773 = vmatpush2.bf16.msra.mxu0 0
        %774 = vmatprep.subr.bf16.mxu0 0
        %775 = vmatpush2.bf16.msra.mxu0 0
        %776 = vmatprep.mubr.bf16.mxu0 0
        %777 = vmatmul.mubr.bf16.gmra.mxu0 %v680
        %v778 = vpop.f32.mrf.mxu0
        %v779 = vadd.f32 %v586, %v778
        %v780 = vpop.f32.mrf.mxu0
        %v781 = vpop.f32.mrf.mxu0
        %v782 = vadd.f32 %v589, %v781
        %v783 = vpop.f32.mrf.mxu0
        %784 = vmatprep.mubr.bf16.mxu0 0
        %785 = vmatmul.mubr.bf16.gmra.mxu0 %v681
        %v786 = vpop.f32.mrf.mxu0
        %v787 = vadd.f32 %v594, %v786
        %v788 = vpop.f32.mrf.mxu0
        %v789 = vpop.f32.mrf.mxu0
        %v790 = vadd.f32 %v597, %v789
        %v791 = vpop.f32.mrf.mxu0
        %792 = vmatprep.mubr.bf16.mxu0 0
        %793 = vmatmul.mubr.bf16.gmra.mxu0 %v682
        %v794 = vpop.f32.mrf.mxu0
        %v795 = vadd.f32 %v602, %v794
        %v796 = vpop.f32.mrf.mxu0
        %v797 = vpop.f32.mrf.mxu0
        %v798 = vadd.f32 %v605, %v797
        %v799 = vpop.f32.mrf.mxu0
        %800 = vmatprep.mubr.bf16.mxu0 0
        %801 = vmatmul.mubr.bf16.gmra.mxu0 %v683
        %v802 = vpop.f32.mrf.mxu0
        %v803 = vadd.f32 %v610, %v802
        %v804 = vpop.f32.mrf.mxu0
        %v805 = vpop.f32.mrf.mxu0
        %v806 = vadd.f32 %v613, %v805
        %v807 = vpop.f32.mrf.mxu0
        %808 = vmatprep.mubr.bf16.mxu0 0
        %809 = vmatmul.mubr.bf16.gmra.mxu0 %v684
        %v810 = vpop.f32.mrf.mxu0
        %v811 = vadd.f32 %v618, %v810
        %v812 = vpop.f32.mrf.mxu0
        %v813 = vpop.f32.mrf.mxu0
        %v814 = vadd.f32 %v621, %v813
        %v815 = vpop.f32.mrf.mxu0
        %816 = vmatprep.mubr.bf16.mxu0 0
        %817 = vmatmul.mubr.bf16.gmra.mxu0 %v685
        %v818 = vpop.f32.mrf.mxu0
        %v819 = vadd.f32 %v626, %v818
        %v820 = vpop.f32.mrf.mxu0
        %v821 = vpop.f32.mrf.mxu0
        %v822 = vadd.f32 %v629, %v821
        %v823 = vpop.f32.mrf.mxu0
        %824 = vmatprep.mubr.bf16.mxu0 0
        %825 = vmatmul.mubr.bf16.gmra.mxu0 %v686
        %v826 = vpop.f32.mrf.mxu0
        %v827 = vadd.f32 %v634, %v826
        %v828 = vpop.f32.mrf.mxu0
        %v829 = vpop.f32.mrf.mxu0
        %v830 = vadd.f32 %v637, %v829
        %v831 = vpop.f32.mrf.mxu0
        %832 = vmatprep.mubr.bf16.mxu0 0
        %833 = vmatmul.mubr.bf16.gmra.mxu0 %v687
        %v834 = vpop.f32.mrf.mxu0
        %v835 = vadd.f32 %v642, %v834
        %v836 = vpop.f32.mrf.mxu0
        %v837 = vpop.f32.mrf.mxu0
        %v838 = vadd.f32 %v645, %v837
        %v839 = vpop.f32.mrf.mxu0
        %840 = vdwg.mxu0
        %v841 = vld [vmem:[%s219] sm:$0xe]
        %v842 = vld [vmem:[%s219 + $0xc] sm:$0xe]
        %v843 = vld [vmem:[%s219 + $0x18] sm:$0xe]
        %v844 = vld [vmem:[%s219 + $0x24] sm:$0xe]
        %v845 = vld [vmem:[%s219 + $0x30] sm:$0xe]
        %v846 = vld [vmem:[%s219 + $0x3c] sm:$0xe]
        %v847 = vld [vmem:[%s219 + $0x48] sm:$0xe]
        %v848 = vld [vmem:[%s219 + $0x54] sm:$0xe]
        %vm865 = vcmask 1042432
        %vm866 = vcmask 1046532
        %vm867 = vmor %vm865, %vm866
        %v868 = vrot.slane %v841, 5
        %v869 = vrot.slane %v868, 4
        %v870 = vrot.slane %v221, 5
        %v871 = vsel %vm867, %v869, %v870
        %v872 = vrot.slane %v870, 4
        %v873 = vrot.slane %v252, 5
        %v874 = vsel %vm867, %v872, %v873
        %v875 = vrot.slane %v842, 5
        %v876 = vrot.slane %v875, 4
        %v877 = vrot.slane %v223, 5
        %v878 = vsel %vm867, %v876, %v877
        %v879 = vrot.slane %v877, 4
        %v880 = vrot.slane %v253, 5
        %v881 = vsel %vm867, %v879, %v880
        %v882 = vrot.slane %v843, 5
        %v883 = vrot.slane %v882, 4
        %v884 = vrot.slane %v225, 5
        %v885 = vsel %vm867, %v883, %v884
        %v886 = vrot.slane %v884, 4
        %v887 = vrot.slane %v254, 5
        %v888 = vsel %vm867, %v886, %v887
        %v889 = vrot.slane %v844, 5
        %v890 = vrot.slane %v889, 4
        %v891 = vrot.slane %v227, 5
        %v892 = vsel %vm867, %v890, %v891
        %v893 = vrot.slane %v891, 4
        %v894 = vrot.slane %v255, 5
        %v895 = vsel %vm867, %v893, %v894
        %v896 = vrot.slane %v845, 5
        %v897 = vrot.slane %v896, 4
        %v898 = vrot.slane %v229, 5
        %v899 = vsel %vm867, %v897, %v898
        %v900 = vrot.slane %v898, 4
        %v901 = vrot.slane %v256, 5
        %v902 = vsel %vm867, %v900, %v901
        %v903 = vrot.slane %v846, 5
        %v904 = vrot.slane %v903, 4
        %v905 = vrot.slane %v231, 5
        %v906 = vsel %vm867, %v904, %v905
        %v907 = vrot.slane %v905, 4
        %v908 = vrot.slane %v257, 5
        %v909 = vsel %vm867, %v907, %v908
        %v910 = vrot.slane %v847, 5
        %v911 = vrot.slane %v910, 4
        %v912 = vrot.slane %v233, 5
        %v913 = vsel %vm867, %v911, %v912
        %v914 = vrot.slane %v912, 4
        %v915 = vrot.slane %v258, 5
        %v916 = vsel %vm867, %v914, %v915
        %v917 = vrot.slane %v848, 5
        %v918 = vrot.slane %v917, 4
        %v919 = vrot.slane %v235, 5
        %v920 = vsel %vm867, %v918, %v919
        %v921 = vrot.slane %v919, 4
        %v922 = vrot.slane %v259, 5
        %v923 = vsel %vm867, %v921, %v922
        %v924 = vld [vmem:[#allocation4 + $0x80] sm:$0xf]
        %v925 = vld [vmem:[#allocation4 + $0x84] sm:$0xf]
        %v926 = vld [vmem:[#allocation4 + $0x88] sm:$0xf]
        %v927 = vld [vmem:[#allocation4 + $0x8c] sm:$0xf]
        %v928 = vld [vmem:[#allocation4 + $0x90] sm:$0xf]
        %v929 = vld [vmem:[#allocation4 + $0x94] sm:$0xf]
        %v930 = vld [vmem:[#allocation4 + $0x98] sm:$0xf]
        %v931 = vld [vmem:[#allocation4 + $0x9c] sm:$0xf]
        %v932 = vld [vmem:[#allocation4 + $0xa0] sm:$0xf]
        %v933 = vld [vmem:[#allocation4 + $0xa4] sm:$0xf]
        %v934 = vld [vmem:[#allocation4 + $0xa8] sm:$0xf]
        %v935 = vld [vmem:[#allocation4 + $0xac] sm:$0xf]
        %v936 = vld [vmem:[#allocation4 + $0xb0] sm:$0xf]
        %v937 = vld [vmem:[#allocation4 + $0xb4] sm:$0xf]
        %v938 = vld [vmem:[#allocation4 + $0xb8] sm:$0xf]
        %v939 = vld [vmem:[#allocation4 + $0xbc] sm:$0xf]
        %v940 = vunpack.c.l.b16 %v871
        %v941 = vunpack.c.l.b16 %v874
        %v942 = vunpack.c.l.b16 %v878
        %v943 = vunpack.c.l.b16 %v881
        %v944 = vunpack.c.l.b16 %v885
        %v945 = vunpack.c.l.b16 %v888
        %v946 = vunpack.c.l.b16 %v892
        %v947 = vunpack.c.l.b16 %v895
        %v948 = vunpack.c.l.b16 %v899
        %v949 = vunpack.c.l.b16 %v902
        %v950 = vunpack.c.l.b16 %v906
        %v951 = vunpack.c.l.b16 %v909
        %v952 = vunpack.c.l.b16 %v913
        %v953 = vunpack.c.l.b16 %v916
        %v954 = vunpack.c.l.b16 %v920
        %v955 = vunpack.c.l.b16 %v923
        %v956 = vpack.c.b16 %v941, %v940
        %v957 = vpack.c.b16 %v943, %v942
        %v958 = vpack.c.b16 %v945, %v944
        %v959 = vpack.c.b16 %v947, %v946
        %v960 = vpack.c.b16 %v949, %v948
        %v961 = vpack.c.b16 %v951, %v950
        %v962 = vpack.c.b16 %v953, %v952
        %v963 = vpack.c.b16 %v955, %v954
        %v988 = vunpack.c.l.b16 %v924
        %v989 = vunpack.c.l.b16 %v925
        %v990 = vunpack.c.l.b16 %v926
        %v991 = vunpack.c.l.b16 %v927
        %v992 = vunpack.c.l.b16 %v928
        %v993 = vunpack.c.l.b16 %v929
        %v994 = vunpack.c.l.b16 %v930
        %v995 = vunpack.c.l.b16 %v931
        %v996 = vunpack.c.l.b16 %v932
        %v997 = vunpack.c.l.b16 %v933
        %v998 = vunpack.c.l.b16 %v934
        %v999 = vunpack.c.l.b16 %v935
        %v1000 = vunpack.c.l.b16 %v936
        %v1001 = vunpack.c.l.b16 %v937
        %v1002 = vunpack.c.l.b16 %v938
        %v1003 = vunpack.c.l.b16 %v939
        %v1004 = vpack.c.b16 %v989, %v988
        %v1005 = vpack.c.b16 %v991, %v990
        %v1006 = vpack.c.b16 %v993, %v992
        %v1007 = vpack.c.b16 %v995, %v994
        %v1008 = vpack.c.b16 %v997, %v996
        %v1009 = vpack.c.b16 %v999, %v998
        %v1010 = vpack.c.b16 %v1001, %v1000
        %v1011 = vpack.c.b16 %v1003, %v1002
        %1020 = vmatprep.subr.bf16.mxu0 0
        %1021 = vmatpush1.bf16.msra.mxu0 %v1011
        %1022 = vmatprep.subr.bf16.mxu0 0
        %1023 = vmatpush1.bf16.msra.mxu0 %v1010
        %1024 = vmatprep.subr.bf16.mxu0 0
        %1025 = vmatpush1.bf16.msra.mxu0 %v1009
        %1026 = vmatprep.subr.bf16.mxu0 0
        %1027 = vmatpush1.bf16.msra.mxu0 %v1008
        %1028 = vmatprep.subr.bf16.mxu0 0
        %1029 = vmatpush1.bf16.msra.mxu0 %v1007
        %1030 = vmatprep.subr.bf16.mxu0 0
        %1031 = vmatpush1.bf16.msra.mxu0 %v1006
        %1032 = vmatprep.subr.bf16.mxu0 0
        %1033 = vmatpush1.bf16.msra.mxu0 %v1005
        %1034 = vmatprep.subr.bf16.mxu0 0
        %1035 = vmatpush1.bf16.msra.mxu0 %v1004
        %1036 = vmatprep.subr.bf16.mxu0 0
        %1037 = vmatpush2.bf16.msra.mxu0 0
        %1038 = vmatprep.subr.bf16.mxu0 0
        %1039 = vmatpush2.bf16.msra.mxu0 0
        %1040 = vmatprep.subr.bf16.mxu0 0
        %1041 = vmatpush2.bf16.msra.mxu0 0
        %1042 = vmatprep.subr.bf16.mxu0 0
        %1043 = vmatpush2.bf16.msra.mxu0 0
        %1044 = vmatprep.subr.bf16.mxu0 0
        %1045 = vmatpush2.bf16.msra.mxu0 0
        %1046 = vmatprep.subr.bf16.mxu0 0
        %1047 = vmatpush2.bf16.msra.mxu0 0
        %1048 = vmatprep.subr.bf16.mxu0 0
        %1049 = vmatpush2.bf16.msra.mxu0 0
        %1050 = vmatprep.subr.bf16.mxu0 0
        %1051 = vmatpush2.bf16.msra.mxu0 0
        %1052 = vmatprep.mubr.bf16.mxu0 0
        %1053 = vmatmul.mubr.bf16.gmra.mxu0 %v956
        %v1054 = vpop.f32.mrf.mxu0
        %v1055 = vadd.f32 0.0, %v1054
        %v1056 = vpop.f32.mrf.mxu0
        %v1057 = vpop.f32.mrf.mxu0
        %v1058 = vadd.f32 0.0, %v1057
        %v1059 = vpop.f32.mrf.mxu0
        %1060 = vmatprep.mubr.bf16.mxu0 0
        %1061 = vmatmul.mubr.bf16.gmra.mxu0 %v957
        %v1062 = vpop.f32.mrf.mxu0
        %v1063 = vadd.f32 0.0, %v1062
        %v1064 = vpop.f32.mrf.mxu0
        %v1065 = vpop.f32.mrf.mxu0
        %v1066 = vadd.f32 0.0, %v1065
        %v1067 = vpop.f32.mrf.mxu0
        %1068 = vmatprep.mubr.bf16.mxu0 0
        %1069 = vmatmul.mubr.bf16.gmra.mxu0 %v958
        %v1070 = vpop.f32.mrf.mxu0
        %v1071 = vadd.f32 0.0, %v1070
        %v1072 = vpop.f32.mrf.mxu0
        %v1073 = vpop.f32.mrf.mxu0
        %v1074 = vadd.f32 0.0, %v1073
        %v1075 = vpop.f32.mrf.mxu0
        %1076 = vmatprep.mubr.bf16.mxu0 0
        %1077 = vmatmul.mubr.bf16.gmra.mxu0 %v959
        %v1078 = vpop.f32.mrf.mxu0
        %v1079 = vadd.f32 0.0, %v1078
        %v1080 = vpop.f32.mrf.mxu0
        %v1081 = vpop.f32.mrf.mxu0
        %v1082 = vadd.f32 0.0, %v1081
        %v1083 = vpop.f32.mrf.mxu0
        %1084 = vmatprep.mubr.bf16.mxu0 0
        %1085 = vmatmul.mubr.bf16.gmra.mxu0 %v960
        %v1086 = vpop.f32.mrf.mxu0
        %v1087 = vadd.f32 0.0, %v1086
        %v1088 = vpop.f32.mrf.mxu0
        %v1089 = vpop.f32.mrf.mxu0
        %v1090 = vadd.f32 0.0, %v1089
        %v1091 = vpop.f32.mrf.mxu0
        %1092 = vmatprep.mubr.bf16.mxu0 0
        %1093 = vmatmul.mubr.bf16.gmra.mxu0 %v961
        %v1094 = vpop.f32.mrf.mxu0
        %v1095 = vadd.f32 0.0, %v1094
        %v1096 = vpop.f32.mrf.mxu0
        %v1097 = vpop.f32.mrf.mxu0
        %v1098 = vadd.f32 0.0, %v1097
        %v1099 = vpop.f32.mrf.mxu0
        %1100 = vmatprep.mubr.bf16.mxu0 0
        %1101 = vmatmul.mubr.bf16.gmra.mxu0 %v962
        %v1102 = vpop.f32.mrf.mxu0
        %v1103 = vadd.f32 0.0, %v1102
        %v1104 = vpop.f32.mrf.mxu0
        %v1105 = vpop.f32.mrf.mxu0
        %v1106 = vadd.f32 0.0, %v1105
        %v1107 = vpop.f32.mrf.mxu0
        %1108 = vmatprep.mubr.bf16.mxu0 0
        %1109 = vmatmul.mubr.bf16.gmra.mxu0 %v963
        %v1110 = vpop.f32.mrf.mxu0
        %v1111 = vadd.f32 0.0, %v1110
        %v1112 = vpop.f32.mrf.mxu0
        %v1113 = vpop.f32.mrf.mxu0
        %v1114 = vadd.f32 0.0, %v1113
        %v1115 = vpop.f32.mrf.mxu0
        %1116 = vdwg.mxu0
        %v1117 = vadd.f32 %v779, %v1055
        %v1118 = vadd.f32 %v782, %v1058
        %v1119 = vadd.f32 %v787, %v1063
        %v1120 = vadd.f32 %v790, %v1066
        %v1121 = vadd.f32 %v795, %v1071
        %v1122 = vadd.f32 %v798, %v1074
        %v1123 = vadd.f32 %v803, %v1079
        %v1124 = vadd.f32 %v806, %v1082
        %v1125 = vadd.f32 %v811, %v1087
        %v1126 = vadd.f32 %v814, %v1090
        %v1127 = vadd.f32 %v819, %v1095
        %v1128 = vadd.f32 %v822, %v1098
        %v1129 = vadd.f32 %v827, %v1103
        %v1130 = vadd.f32 %v830, %v1106
        %v1131 = vadd.f32 %v835, %v1111
        %v1132 = vadd.f32 %v838, %v1114
        %s1133 = sadd.s32 3, %s217
        %s1134 = smul.addr %s1133, 4
        %s1135 = scalar_lea.vmem [#allocation2], %s1134
        %v1136 = vld [vmem:[%s1135] sm:$0xf]
        %v1137 = vld [vmem:[%s1135 + $0x4] sm:$0xf]
        %v1138 = vld [vmem:[%s1135 + $0xc] sm:$0xf]
        %v1139 = vld [vmem:[%s1135 + $0x10] sm:$0xf]
        %v1140 = vld [vmem:[%s1135 + $0x18] sm:$0xf]
        %v1141 = vld [vmem:[%s1135 + $0x1c] sm:$0xf]
        %v1142 = vld [vmem:[%s1135 + $0x24] sm:$0xf]
        %v1143 = vld [vmem:[%s1135 + $0x28] sm:$0xf]
        %v1144 = vld [vmem:[%s1135 + $0x30] sm:$0xf]
        %v1145 = vld [vmem:[%s1135 + $0x34] sm:$0xf]
        %v1146 = vld [vmem:[%s1135 + $0x3c] sm:$0xf]
        %v1147 = vld [vmem:[%s1135 + $0x40] sm:$0xf]
        %v1148 = vld [vmem:[%s1135 + $0x48] sm:$0xf]
        %v1149 = vld [vmem:[%s1135 + $0x4c] sm:$0xf]
        %v1150 = vld [vmem:[%s1135 + $0x54] sm:$0xf]
        %v1151 = vld [vmem:[%s1135 + $0x58] sm:$0xf]
        %v1152 = vld [vmem:[#allocation4 + $0xc0] sm:$0xf]
        %v1153 = vld [vmem:[#allocation4 + $0xc4] sm:$0xf]
        %v1154 = vld [vmem:[#allocation4 + $0xc8] sm:$0xf]
        %v1155 = vld [vmem:[#allocation4 + $0xcc] sm:$0xf]
        %v1156 = vld [vmem:[#allocation4 + $0xd0] sm:$0xf]
        %v1157 = vld [vmem:[#allocation4 + $0xd4] sm:$0xf]
        %v1158 = vld [vmem:[#allocation4 + $0xd8] sm:$0xf]
        %v1159 = vld [vmem:[#allocation4 + $0xdc] sm:$0xf]
        %v1160 = vld [vmem:[#allocation4 + $0xe0] sm:$0xf]
        %v1161 = vld [vmem:[#allocation4 + $0xe4] sm:$0xf]
        %v1162 = vld [vmem:[#allocation4 + $0xe8] sm:$0xf]
        %v1163 = vld [vmem:[#allocation4 + $0xec] sm:$0xf]
        %v1164 = vld [vmem:[#allocation4 + $0xf0] sm:$0xf]
        %v1165 = vld [vmem:[#allocation4 + $0xf4] sm:$0xf]
        %v1166 = vld [vmem:[#allocation4 + $0xf8] sm:$0xf]
        %v1167 = vld [vmem:[#allocation4 + $0xfc] sm:$0xf]
        %v1184 = vunpack.c.l.b16 %v1136
        %v1185 = vunpack.c.l.b16 %v1137
        %v1186 = vunpack.c.l.b16 %v1138
        %v1187 = vunpack.c.l.b16 %v1139
        %v1188 = vunpack.c.l.b16 %v1140
        %v1189 = vunpack.c.l.b16 %v1141
        %v1190 = vunpack.c.l.b16 %v1142
        %v1191 = vunpack.c.l.b16 %v1143
        %v1192 = vunpack.c.l.b16 %v1144
        %v1193 = vunpack.c.l.b16 %v1145
        %v1194 = vunpack.c.l.b16 %v1146
        %v1195 = vunpack.c.l.b16 %v1147
        %v1196 = vunpack.c.l.b16 %v1148
        %v1197 = vunpack.c.l.b16 %v1149
        %v1198 = vunpack.c.l.b16 %v1150
        %v1199 = vunpack.c.l.b16 %v1151
        %v1200 = vpack.c.b16 %v1185, %v1184
        %v1201 = vpack.c.b16 %v1187, %v1186
        %v1202 = vpack.c.b16 %v1189, %v1188
        %v1203 = vpack.c.b16 %v1191, %v1190
        %v1204 = vpack.c.b16 %v1193, %v1192
        %v1205 = vpack.c.b16 %v1195, %v1194
        %v1206 = vpack.c.b16 %v1197, %v1196
        %v1207 = vpack.c.b16 %v1199, %v1198
        %v1232 = vunpack.c.l.b16 %v1152
        %v1233 = vunpack.c.l.b16 %v1153
        %v1234 = vunpack.c.l.b16 %v1154
        %v1235 = vunpack.c.l.b16 %v1155
        %v1236 = vunpack.c.l.b16 %v1156
        %v1237 = vunpack.c.l.b16 %v1157
        %v1238 = vunpack.c.l.b16 %v1158
        %v1239 = vunpack.c.l.b16 %v1159
        %v1240 = vunpack.c.l.b16 %v1160
        %v1241 = vunpack.c.l.b16 %v1161
        %v1242 = vunpack.c.l.b16 %v1162
        %v1243 = vunpack.c.l.b16 %v1163
        %v1244 = vunpack.c.l.b16 %v1164
        %v1245 = vunpack.c.l.b16 %v1165
        %v1246 = vunpack.c.l.b16 %v1166
        %v1247 = vunpack.c.l.b16 %v1167
        %v1248 = vpack.c.b16 %v1233, %v1232
        %v1249 = vpack.c.b16 %v1235, %v1234
        %v1250 = vpack.c.b16 %v1237, %v1236
        %v1251 = vpack.c.b16 %v1239, %v1238
        %v1252 = vpack.c.b16 %v1241, %v1240
        %v1253 = vpack.c.b16 %v1243, %v1242
        %v1254 = vpack.c.b16 %v1245, %v1244
        %v1255 = vpack.c.b16 %v1247, %v1246
        %1264 = vmatprep.subr.bf16.mxu0 0
        %1265 = vmatpush1.bf16.msra.mxu0 %v1255
        %1266 = vmatprep.subr.bf16.mxu0 0
        %1267 = vmatpush1.bf16.msra.mxu0 %v1254
        %1268 = vmatprep.subr.bf16.mxu0 0
        %1269 = vmatpush1.bf16.msra.mxu0 %v1253
        %1270 = vmatprep.subr.bf16.mxu0 0
        %1271 = vmatpush1.bf16.msra.mxu0 %v1252
        %1272 = vmatprep.subr.bf16.mxu0 0
        %1273 = vmatpush1.bf16.msra.mxu0 %v1251
        %1274 = vmatprep.subr.bf16.mxu0 0
        %1275 = vmatpush1.bf16.msra.mxu0 %v1250
        %1276 = vmatprep.subr.bf16.mxu0 0
        %1277 = vmatpush1.bf16.msra.mxu0 %v1249
        %1278 = vmatprep.subr.bf16.mxu0 0
        %1279 = vmatpush1.bf16.msra.mxu0 %v1248
        %1280 = vmatprep.subr.bf16.mxu0 0
        %1281 = vmatpush2.bf16.msra.mxu0 0
        %1282 = vmatprep.subr.bf16.mxu0 0
        %1283 = vmatpush2.bf16.msra.mxu0 0
        %1284 = vmatprep.subr.bf16.mxu0 0
        %1285 = vmatpush2.bf16.msra.mxu0 0
        %1286 = vmatprep.subr.bf16.mxu0 0
        %1287 = vmatpush2.bf16.msra.mxu0 0
        %1288 = vmatprep.subr.bf16.mxu0 0
        %1289 = vmatpush2.bf16.msra.mxu0 0
        %1290 = vmatprep.subr.bf16.mxu0 0
        %1291 = vmatpush2.bf16.msra.mxu0 0
        %1292 = vmatprep.subr.bf16.mxu0 0
        %1293 = vmatpush2.bf16.msra.mxu0 0
        %1294 = vmatprep.subr.bf16.mxu0 0
        %1295 = vmatpush2.bf16.msra.mxu0 0
        %1296 = vmatprep.mubr.bf16.mxu0 0
        %1297 = vmatmul.mubr.bf16.gmra.mxu0 %v1200
        %v1298 = vpop.f32.mrf.mxu0
        %v1299 = vadd.f32 0.0, %v1298
        %v1300 = vpop.f32.mrf.mxu0
        %v1301 = vpop.f32.mrf.mxu0
        %v1302 = vadd.f32 0.0, %v1301
        %v1303 = vpop.f32.mrf.mxu0
        %1304 = vmatprep.mubr.bf16.mxu0 0
        %1305 = vmatmul.mubr.bf16.gmra.mxu0 %v1201
        %v1306 = vpop.f32.mrf.mxu0
        %v1307 = vadd.f32 0.0, %v1306
        %v1308 = vpop.f32.mrf.mxu0
        %v1309 = vpop.f32.mrf.mxu0
        %v1310 = vadd.f32 0.0, %v1309
        %v1311 = vpop.f32.mrf.mxu0
        %1312 = vmatprep.mubr.bf16.mxu0 0
        %1313 = vmatmul.mubr.bf16.gmra.mxu0 %v1202
        %v1314 = vpop.f32.mrf.mxu0
        %v1315 = vadd.f32 0.0, %v1314
        %v1316 = vpop.f32.mrf.mxu0
        %v1317 = vpop.f32.mrf.mxu0
        %v1318 = vadd.f32 0.0, %v1317
        %v1319 = vpop.f32.mrf.mxu0
        %1320 = vmatprep.mubr.bf16.mxu0 0
        %1321 = vmatmul.mubr.bf16.gmra.mxu0 %v1203
        %v1322 = vpop.f32.mrf.mxu0
        %v1323 = vadd.f32 0.0, %v1322
        %v1324 = vpop.f32.mrf.mxu0
        %v1325 = vpop.f32.mrf.mxu0
        %v1326 = vadd.f32 0.0, %v1325
        %v1327 = vpop.f32.mrf.mxu0
        %1328 = vmatprep.mubr.bf16.mxu0 0
        %1329 = vmatmul.mubr.bf16.gmra.mxu0 %v1204
        %v1330 = vpop.f32.mrf.mxu0
        %v1331 = vadd.f32 0.0, %v1330
        %v1332 = vpop.f32.mrf.mxu0
        %v1333 = vpop.f32.mrf.mxu0
        %v1334 = vadd.f32 0.0, %v1333
        %v1335 = vpop.f32.mrf.mxu0
        %1336 = vmatprep.mubr.bf16.mxu0 0
        %1337 = vmatmul.mubr.bf16.gmra.mxu0 %v1205
        %v1338 = vpop.f32.mrf.mxu0
        %v1339 = vadd.f32 0.0, %v1338
        %v1340 = vpop.f32.mrf.mxu0
        %v1341 = vpop.f32.mrf.mxu0
        %v1342 = vadd.f32 0.0, %v1341
        %v1343 = vpop.f32.mrf.mxu0
        %1344 = vmatprep.mubr.bf16.mxu0 0
        %1345 = vmatmul.mubr.bf16.gmra.mxu0 %v1206
        %v1346 = vpop.f32.mrf.mxu0
        %v1347 = vadd.f32 0.0, %v1346
        %v1348 = vpop.f32.mrf.mxu0
        %v1349 = vpop.f32.mrf.mxu0
        %v1350 = vadd.f32 0.0, %v1349
        %v1351 = vpop.f32.mrf.mxu0
        %1352 = vmatprep.mubr.bf16.mxu0 0
        %1353 = vmatmul.mubr.bf16.gmra.mxu0 %v1207
        %v1354 = vpop.f32.mrf.mxu0
        %v1355 = vadd.f32 0.0, %v1354
        %v1356 = vpop.f32.mrf.mxu0
        %v1357 = vpop.f32.mrf.mxu0
        %v1358 = vadd.f32 0.0, %v1357
        %v1359 = vpop.f32.mrf.mxu0
        %1360 = vdwg.mxu0
        %v1361 = vadd.f32 %v1117, %v1299
        %v1362 = vadd.f32 %v1118, %v1302
        %v1363 = vadd.f32 %v1119, %v1307
        %v1364 = vadd.f32 %v1120, %v1310
        %v1365 = vadd.f32 %v1121, %v1315
        %v1366 = vadd.f32 %v1122, %v1318
        %v1367 = vadd.f32 %v1123, %v1323
        %v1368 = vadd.f32 %v1124, %v1326
        %v1369 = vadd.f32 %v1125, %v1331
        %v1370 = vadd.f32 %v1126, %v1334
        %v1371 = vadd.f32 %v1127, %v1339
        %v1372 = vadd.f32 %v1128, %v1342
        %v1373 = vadd.f32 %v1129, %v1347
        %v1374 = vadd.f32 %v1130, %v1350
        %v1375 = vadd.f32 %v1131, %v1355
        %v1376 = vadd.f32 %v1132, %v1358
        %v1377 = vld [vmem:[%s1135] sm:$0xf]
        %v1378 = vld [vmem:[%s1135 + $0x4] sm:$0xf]
        %v1379 = vld [vmem:[%s1135 + $0x8] sm:$0x1]
        %v1380 = vld [vmem:[%s1135 + $0xc] sm:$0xf]
        %v1381 = vld [vmem:[%s1135 + $0x10] sm:$0xf]
        %v1382 = vld [vmem:[%s1135 + $0x14] sm:$0x1]
        %v1383 = vld [vmem:[%s1135 + $0x18] sm:$0xf]
        %v1384 = vld [vmem:[%s1135 + $0x1c] sm:$0xf]
        %v1385 = vld [vmem:[%s1135 + $0x20] sm:$0x1]
        %v1386 = vld [vmem:[%s1135 + $0x24] sm:$0xf]
        %v1387 = vld [vmem:[%s1135 + $0x28] sm:$0xf]
        %v1388 = vld [vmem:[%s1135 + $0x2c] sm:$0x1]
        %v1389 = vld [vmem:[%s1135 + $0x30] sm:$0xf]
        %v1390 = vld [vmem:[%s1135 + $0x34] sm:$0xf]
        %v1391 = vld [vmem:[%s1135 + $0x38] sm:$0x1]
        %v1392 = vld [vmem:[%s1135 + $0x3c] sm:$0xf]
        %v1393 = vld [vmem:[%s1135 + $0x40] sm:$0xf]
        %v1394 = vld [vmem:[%s1135 + $0x44] sm:$0x1]
        %v1395 = vld [vmem:[%s1135 + $0x48] sm:$0xf]
        %v1396 = vld [vmem:[%s1135 + $0x4c] sm:$0xf]
        %v1397 = vld [vmem:[%s1135 + $0x50] sm:$0x1]
        %v1398 = vld [vmem:[%s1135 + $0x54] sm:$0xf]
        %v1399 = vld [vmem:[%s1135 + $0x58] sm:$0xf]
        %v1400 = vld [vmem:[%s1135 + $0x5c] sm:$0x1]
        %v1402 = vshrl.u32 %v1377, 16
        %v1404 = vrot.slane %v1402, 4
        %v1405 = vshll.u32 %v1377, 16
        %v1407 = vrot.slane %v1405, 5
        %v1408 = vor.u32 %v1404, %v1407
        %v1409 = vrot.slane %v1408, 4
        %v1411 = vshll.u32 %v1378, 16
        %v1413 = vrot.slane %v1411, 5
        %v1414 = vsel %vm262, %v1409, %v1413
        %v1415 = vshrl.u32 %v1378, 16
        %v1417 = vrot.slane %v1415, 4
        %v1418 = vor.u32 %v1417, %v1413
        %v1419 = vrot.slane %v1418, 4
        %v1421 = vshll.u32 %v1379, 16
        %v1423 = vrot.slane %v1421, 5
        %v1424 = vsel %vm262, %v1419, %v1423
        %v1426 = vshrl.u32 %v1380, 16
        %v1428 = vrot.slane %v1426, 4
        %v1429 = vshll.u32 %v1380, 16
        %v1431 = vrot.slane %v1429, 5
        %v1432 = vor.u32 %v1428, %v1431
        %v1433 = vrot.slane %v1432, 4
        %v1435 = vshll.u32 %v1381, 16
        %v1437 = vrot.slane %v1435, 5
        %v1438 = vsel %vm262, %v1433, %v1437
        %v1439 = vshrl.u32 %v1381, 16
        %v1441 = vrot.slane %v1439, 4
        %v1442 = vor.u32 %v1441, %v1437
        %v1443 = vrot.slane %v1442, 4
        %v1445 = vshll.u32 %v1382, 16
        %v1447 = vrot.slane %v1445, 5
        %v1448 = vsel %vm262, %v1443, %v1447
        %v1450 = vshrl.u32 %v1383, 16
        %v1452 = vrot.slane %v1450, 4
        %v1453 = vshll.u32 %v1383, 16
        %v1455 = vrot.slane %v1453, 5
        %v1456 = vor.u32 %v1452, %v1455
        %v1457 = vrot.slane %v1456, 4
        %v1459 = vshll.u32 %v1384, 16
        %v1461 = vrot.slane %v1459, 5
        %v1462 = vsel %vm262, %v1457, %v1461
        %v1463 = vshrl.u32 %v1384, 16
        %v1465 = vrot.slane %v1463, 4
        %v1466 = vor.u32 %v1465, %v1461
        %v1467 = vrot.slane %v1466, 4
        %v1469 = vshll.u32 %v1385, 16
        %v1471 = vrot.slane %v1469, 5
        %v1472 = vsel %vm262, %v1467, %v1471
        %v1474 = vshrl.u32 %v1386, 16
        %v1476 = vrot.slane %v1474, 4
        %v1477 = vshll.u32 %v1386, 16
        %v1479 = vrot.slane %v1477, 5
        %v1480 = vor.u32 %v1476, %v1479
        %v1481 = vrot.slane %v1480, 4
        %v1483 = vshll.u32 %v1387, 16
        %v1485 = vrot.slane %v1483, 5
        %v1486 = vsel %vm262, %v1481, %v1485
        %v1487 = vshrl.u32 %v1387, 16
        %v1489 = vrot.slane %v1487, 4
        %v1490 = vor.u32 %v1489, %v1485
        %v1491 = vrot.slane %v1490, 4
        %v1493 = vshll.u32 %v1388, 16
        %v1495 = vrot.slane %v1493, 5
        %v1496 = vsel %vm262, %v1491, %v1495
        %v1498 = vshrl.u32 %v1389, 16
        %v1500 = vrot.slane %v1498, 4
        %v1501 = vshll.u32 %v1389, 16
        %v1503 = vrot.slane %v1501, 5
        %v1504 = vor.u32 %v1500, %v1503
        %v1505 = vrot.slane %v1504, 4
        %v1507 = vshll.u32 %v1390, 16
        %v1509 = vrot.slane %v1507, 5
        %v1510 = vsel %vm262, %v1505, %v1509
        %v1511 = vshrl.u32 %v1390, 16
        %v1513 = vrot.slane %v1511, 4
        %v1514 = vor.u32 %v1513, %v1509
        %v1515 = vrot.slane %v1514, 4
        %v1517 = vshll.u32 %v1391, 16
        %v1519 = vrot.slane %v1517, 5
        %v1520 = vsel %vm262, %v1515, %v1519
        %v1522 = vshrl.u32 %v1392, 16
        %v1524 = vrot.slane %v1522, 4
        %v1525 = vshll.u32 %v1392, 16
        %v1527 = vrot.slane %v1525, 5
        %v1528 = vor.u32 %v1524, %v1527
        %v1529 = vrot.slane %v1528, 4
        %v1531 = vshll.u32 %v1393, 16
        %v1533 = vrot.slane %v1531, 5
        %v1534 = vsel %vm262, %v1529, %v1533
        %v1535 = vshrl.u32 %v1393, 16
        %v1537 = vrot.slane %v1535, 4
        %v1538 = vor.u32 %v1537, %v1533
        %v1539 = vrot.slane %v1538, 4
        %v1541 = vshll.u32 %v1394, 16
        %v1543 = vrot.slane %v1541, 5
        %v1544 = vsel %vm262, %v1539, %v1543
        %v1546 = vshrl.u32 %v1395, 16
        %v1548 = vrot.slane %v1546, 4
        %v1549 = vshll.u32 %v1395, 16
        %v1551 = vrot.slane %v1549, 5
        %v1552 = vor.u32 %v1548, %v1551
        %v1553 = vrot.slane %v1552, 4
        %v1555 = vshll.u32 %v1396, 16
        %v1557 = vrot.slane %v1555, 5
        %v1558 = vsel %vm262, %v1553, %v1557
        %v1559 = vshrl.u32 %v1396, 16
        %v1561 = vrot.slane %v1559, 4
        %v1562 = vor.u32 %v1561, %v1557
        %v1563 = vrot.slane %v1562, 4
        %v1565 = vshll.u32 %v1397, 16
        %v1567 = vrot.slane %v1565, 5
        %v1568 = vsel %vm262, %v1563, %v1567
        %v1570 = vshrl.u32 %v1398, 16
        %v1572 = vrot.slane %v1570, 4
        %v1573 = vshll.u32 %v1398, 16
        %v1575 = vrot.slane %v1573, 5
        %v1576 = vor.u32 %v1572, %v1575
        %v1577 = vrot.slane %v1576, 4
        %v1579 = vshll.u32 %v1399, 16
        %v1581 = vrot.slane %v1579, 5
        %v1582 = vsel %vm262, %v1577, %v1581
        %v1583 = vshrl.u32 %v1399, 16
        %v1585 = vrot.slane %v1583, 4
        %v1586 = vor.u32 %v1585, %v1581
        %v1587 = vrot.slane %v1586, 4
        %v1589 = vshll.u32 %v1400, 16
        %v1591 = vrot.slane %v1589, 5
        %v1592 = vsel %vm262, %v1587, %v1591
        %v1593 = vld [vmem:[#allocation4 + $0x100] sm:$0xf]
        %v1594 = vld [vmem:[#allocation4 + $0x104] sm:$0xf]
        %v1595 = vld [vmem:[#allocation4 + $0x108] sm:$0xf]
        %v1596 = vld [vmem:[#allocation4 + $0x10c] sm:$0xf]
        %v1597 = vld [vmem:[#allocation4 + $0x110] sm:$0xf]
        %v1598 = vld [vmem:[#allocation4 + $0x114] sm:$0xf]
        %v1599 = vld [vmem:[#allocation4 + $0x118] sm:$0xf]
        %v1600 = vld [vmem:[#allocation4 + $0x11c] sm:$0xf]
        %v1601 = vld [vmem:[#allocation4 + $0x120] sm:$0xf]
        %v1602 = vld [vmem:[#allocation4 + $0x124] sm:$0xf]
        %v1603 = vld [vmem:[#allocation4 + $0x128] sm:$0xf]
        %v1604 = vld [vmem:[#allocation4 + $0x12c] sm:$0xf]
        %v1605 = vld [vmem:[#allocation4 + $0x130] sm:$0xf]
        %v1606 = vld [vmem:[#allocation4 + $0x134] sm:$0xf]
        %v1607 = vld [vmem:[#allocation4 + $0x138] sm:$0xf]
        %v1608 = vld [vmem:[#allocation4 + $0x13c] sm:$0xf]
        %v1609 = vunpack.c.l.b16 %v1414
        %v1610 = vunpack.c.l.b16 %v1424
        %v1611 = vunpack.c.l.b16 %v1438
        %v1612 = vunpack.c.l.b16 %v1448
        %v1613 = vunpack.c.l.b16 %v1462
        %v1614 = vunpack.c.l.b16 %v1472
        %v1615 = vunpack.c.l.b16 %v1486
        %v1616 = vunpack.c.l.b16 %v1496
        %v1617 = vunpack.c.l.b16 %v1510
        %v1618 = vunpack.c.l.b16 %v1520
        %v1619 = vunpack.c.l.b16 %v1534
        %v1620 = vunpack.c.l.b16 %v1544
        %v1621 = vunpack.c.l.b16 %v1558
        %v1622 = vunpack.c.l.b16 %v1568
        %v1623 = vunpack.c.l.b16 %v1582
        %v1624 = vunpack.c.l.b16 %v1592
        %v1625 = vpack.c.b16 %v1610, %v1609
        %v1626 = vpack.c.b16 %v1612, %v1611
        %v1627 = vpack.c.b16 %v1614, %v1613
        %v1628 = vpack.c.b16 %v1616, %v1615
        %v1629 = vpack.c.b16 %v1618, %v1617
        %v1630 = vpack.c.b16 %v1620, %v1619
        %v1631 = vpack.c.b16 %v1622, %v1621
        %v1632 = vpack.c.b16 %v1624, %v1623
        %v1657 = vunpack.c.l.b16 %v1593
        %v1658 = vunpack.c.l.b16 %v1594
        %v1659 = vunpack.c.l.b16 %v1595
        %v1660 = vunpack.c.l.b16 %v1596
        %v1661 = vunpack.c.l.b16 %v1597
        %v1662 = vunpack.c.l.b16 %v1598
        %v1663 = vunpack.c.l.b16 %v1599
        %v1664 = vunpack.c.l.b16 %v1600
        %v1665 = vunpack.c.l.b16 %v1601
        %v1666 = vunpack.c.l.b16 %v1602
        %v1667 = vunpack.c.l.b16 %v1603
        %v1668 = vunpack.c.l.b16 %v1604
        %v1669 = vunpack.c.l.b16 %v1605
        %v1670 = vunpack.c.l.b16 %v1606
        %v1671 = vunpack.c.l.b16 %v1607
        %v1672 = vunpack.c.l.b16 %v1608
        %v1673 = vpack.c.b16 %v1658, %v1657
        %v1674 = vpack.c.b16 %v1660, %v1659
        %v1675 = vpack.c.b16 %v1662, %v1661
        %v1676 = vpack.c.b16 %v1664, %v1663
        %v1677 = vpack.c.b16 %v1666, %v1665
        %v1678 = vpack.c.b16 %v1668, %v1667
        %v1679 = vpack.c.b16 %v1670, %v1669
        %v1680 = vpack.c.b16 %v1672, %v1671
        %1689 = vmatprep.subr.bf16.mxu0 0
        %1690 = vmatpush1.bf16.msra.mxu0 %v1680
        %1691 = vmatprep.subr.bf16.mxu0 0
        %1692 = vmatpush1.bf16.msra.mxu0 %v1679
        %1693 = vmatprep.subr.bf16.mxu0 0
        %1694 = vmatpush1.bf16.msra.mxu0 %v1678
        %1695 = vmatprep.subr.bf16.mxu0 0
        %1696 = vmatpush1.bf16.msra.mxu0 %v1677
        %1697 = vmatprep.subr.bf16.mxu0 0
        %1698 = vmatpush1.bf16.msra.mxu0 %v1676
        %1699 = vmatprep.subr.bf16.mxu0 0
        %1700 = vmatpush1.bf16.msra.mxu0 %v1675
        %1701 = vmatprep.subr.bf16.mxu0 0
        %1702 = vmatpush1.bf16.msra.mxu0 %v1674
        %1703 = vmatprep.subr.bf16.mxu0 0
        %1704 = vmatpush1.bf16.msra.mxu0 %v1673
        %1705 = vmatprep.subr.bf16.mxu0 0
        %1706 = vmatpush2.bf16.msra.mxu0 0
        %1707 = vmatprep.subr.bf16.mxu0 0
        %1708 = vmatpush2.bf16.msra.mxu0 0
        %1709 = vmatprep.subr.bf16.mxu0 0
        %1710 = vmatpush2.bf16.msra.mxu0 0
        %1711 = vmatprep.subr.bf16.mxu0 0
        %1712 = vmatpush2.bf16.msra.mxu0 0
        %1713 = vmatprep.subr.bf16.mxu0 0
        %1714 = vmatpush2.bf16.msra.mxu0 0
        %1715 = vmatprep.subr.bf16.mxu0 0
        %1716 = vmatpush2.bf16.msra.mxu0 0
        %1717 = vmatprep.subr.bf16.mxu0 0
        %1718 = vmatpush2.bf16.msra.mxu0 0
        %1719 = vmatprep.subr.bf16.mxu0 0
        %1720 = vmatpush2.bf16.msra.mxu0 0
        %1721 = vmatprep.mubr.bf16.mxu0 0
        %1722 = vmatmul.mubr.bf16.gmra.mxu0 %v1625
        %v1723 = vpop.f32.mrf.mxu0
        %v1724 = vadd.f32 0.0, %v1723
        %v1725 = vpop.f32.mrf.mxu0
        %v1726 = vpop.f32.mrf.mxu0
        %v1727 = vadd.f32 0.0, %v1726
        %v1728 = vpop.f32.mrf.mxu0
        %1729 = vmatprep.mubr.bf16.mxu0 0
        %1730 = vmatmul.mubr.bf16.gmra.mxu0 %v1626
        %v1731 = vpop.f32.mrf.mxu0
        %v1732 = vadd.f32 0.0, %v1731
        %v1733 = vpop.f32.mrf.mxu0
        %v1734 = vpop.f32.mrf.mxu0
        %v1735 = vadd.f32 0.0, %v1734
        %v1736 = vpop.f32.mrf.mxu0
        %1737 = vmatprep.mubr.bf16.mxu0 0
        %1738 = vmatmul.mubr.bf16.gmra.mxu0 %v1627
        %v1739 = vpop.f32.mrf.mxu0
        %v1740 = vadd.f32 0.0, %v1739
        %v1741 = vpop.f32.mrf.mxu0
        %v1742 = vpop.f32.mrf.mxu0
        %v1743 = vadd.f32 0.0, %v1742
        %v1744 = vpop.f32.mrf.mxu0
        %1745 = vmatprep.mubr.bf16.mxu0 0
        %1746 = vmatmul.mubr.bf16.gmra.mxu0 %v1628
        %v1747 = vpop.f32.mrf.mxu0
        %v1748 = vadd.f32 0.0, %v1747
        %v1749 = vpop.f32.mrf.mxu0
        %v1750 = vpop.f32.mrf.mxu0
        %v1751 = vadd.f32 0.0, %v1750
        %v1752 = vpop.f32.mrf.mxu0
        %1753 = vmatprep.mubr.bf16.mxu0 0
        %1754 = vmatmul.mubr.bf16.gmra.mxu0 %v1629
        %v1755 = vpop.f32.mrf.mxu0
        %v1756 = vadd.f32 0.0, %v1755
        %v1757 = vpop.f32.mrf.mxu0
        %v1758 = vpop.f32.mrf.mxu0
        %v1759 = vadd.f32 0.0, %v1758
        %v1760 = vpop.f32.mrf.mxu0
        %1761 = vmatprep.mubr.bf16.mxu0 0
        %1762 = vmatmul.mubr.bf16.gmra.mxu0 %v1630
        %v1763 = vpop.f32.mrf.mxu0
        %v1764 = vadd.f32 0.0, %v1763
        %v1765 = vpop.f32.mrf.mxu0
        %v1766 = vpop.f32.mrf.mxu0
        %v1767 = vadd.f32 0.0, %v1766
        %v1768 = vpop.f32.mrf.mxu0
        %1769 = vmatprep.mubr.bf16.mxu0 0
        %1770 = vmatmul.mubr.bf16.gmra.mxu0 %v1631
        %v1771 = vpop.f32.mrf.mxu0
        %v1772 = vadd.f32 0.0, %v1771
        %v1773 = vpop.f32.mrf.mxu0
        %v1774 = vpop.f32.mrf.mxu0
        %v1775 = vadd.f32 0.0, %v1774
        %v1776 = vpop.f32.mrf.mxu0
        %1777 = vmatprep.mubr.bf16.mxu0 0
        %1778 = vmatmul.mubr.bf16.gmra.mxu0 %v1632
        %v1779 = vpop.f32.mrf.mxu0
        %v1780 = vadd.f32 0.0, %v1779
        %v1781 = vpop.f32.mrf.mxu0
        %v1782 = vpop.f32.mrf.mxu0
        %v1783 = vadd.f32 0.0, %v1782
        %v1784 = vpop.f32.mrf.mxu0
        %1785 = vdwg.mxu0
        %v1786 = vadd.f32 %v1361, %v1724
        %v1787 = vadd.f32 %v1362, %v1727
        %v1788 = vadd.f32 %v1363, %v1732
        %v1789 = vadd.f32 %v1364, %v1735
        %v1790 = vadd.f32 %v1365, %v1740
        %v1791 = vadd.f32 %v1366, %v1743
        %v1792 = vadd.f32 %v1367, %v1748
        %v1793 = vadd.f32 %v1368, %v1751
        %v1794 = vadd.f32 %v1369, %v1756
        %v1795 = vadd.f32 %v1370, %v1759
        %v1796 = vadd.f32 %v1371, %v1764
        %v1797 = vadd.f32 %v1372, %v1767
        %v1798 = vadd.f32 %v1373, %v1772
        %v1799 = vadd.f32 %v1374, %v1775
        %v1800 = vadd.f32 %v1375, %v1780
        %v1801 = vadd.f32 %v1376, %v1783
        %v1802 = vld [vmem:[%s1135] sm:$0xe]
        %v1803 = vld [vmem:[%s1135 + $0xc] sm:$0xe]
        %v1804 = vld [vmem:[%s1135 + $0x18] sm:$0xe]
        %v1805 = vld [vmem:[%s1135 + $0x24] sm:$0xe]
        %v1806 = vld [vmem:[%s1135 + $0x30] sm:$0xe]
        %v1807 = vld [vmem:[%s1135 + $0x3c] sm:$0xe]
        %v1808 = vld [vmem:[%s1135 + $0x48] sm:$0xe]
        %v1809 = vld [vmem:[%s1135 + $0x54] sm:$0xe]
        %v1834 = vrot.slane %v1802, 5
        %v1835 = vrot.slane %v1834, 4
        %v1836 = vrot.slane %v1378, 5
        %v1837 = vsel %vm867, %v1835, %v1836
        %v1838 = vrot.slane %v1836, 4
        %v1839 = vrot.slane %v1379, 5
        %v1840 = vsel %vm867, %v1838, %v1839
        %v1841 = vrot.slane %v1803, 5
        %v1842 = vrot.slane %v1841, 4
        %v1843 = vrot.slane %v1381, 5
        %v1844 = vsel %vm867, %v1842, %v1843
        %v1845 = vrot.slane %v1843, 4
        %v1846 = vrot.slane %v1382, 5
        %v1847 = vsel %vm867, %v1845, %v1846
        %v1848 = vrot.slane %v1804, 5
        %v1849 = vrot.slane %v1848, 4
        %v1850 = vrot.slane %v1384, 5
        %v1851 = vsel %vm867, %v1849, %v1850
        %v1852 = vrot.slane %v1850, 4
        %v1853 = vrot.slane %v1385, 5
        %v1854 = vsel %vm867, %v1852, %v1853
        %v1855 = vrot.slane %v1805, 5
        %v1856 = vrot.slane %v1855, 4
        %v1857 = vrot.slane %v1387, 5
        %v1858 = vsel %vm867, %v1856, %v1857
        %v1859 = vrot.slane %v1857, 4
        %v1860 = vrot.slane %v1388, 5
        %v1861 = vsel %vm867, %v1859, %v1860
        %v1862 = vrot.slane %v1806, 5
        %v1863 = vrot.slane %v1862, 4
        %v1864 = vrot.slane %v1390, 5
        %v1865 = vsel %vm867, %v1863, %v1864
        %v1866 = vrot.slane %v1864, 4
        %v1867 = vrot.slane %v1391, 5
        %v1868 = vsel %vm867, %v1866, %v1867
        %v1869 = vrot.slane %v1807, 5
        %v1870 = vrot.slane %v1869, 4
        %v1871 = vrot.slane %v1393, 5
        %v1872 = vsel %vm867, %v1870, %v1871
        %v1873 = vrot.slane %v1871, 4
        %v1874 = vrot.slane %v1394, 5
        %v1875 = vsel %vm867, %v1873, %v1874
        %v1876 = vrot.slane %v1808, 5
        %v1877 = vrot.slane %v1876, 4
        %v1878 = vrot.slane %v1396, 5
        %v1879 = vsel %vm867, %v1877, %v1878
        %v1880 = vrot.slane %v1878, 4
        %v1881 = vrot.slane %v1397, 5
        %v1882 = vsel %vm867, %v1880, %v1881
        %v1883 = vrot.slane %v1809, 5
        %v1884 = vrot.slane %v1883, 4
        %v1885 = vrot.slane %v1399, 5
        %v1886 = vsel %vm867, %v1884, %v1885
        %v1887 = vrot.slane %v1885, 4
        %v1888 = vrot.slane %v1400, 5
        %v1889 = vsel %vm867, %v1887, %v1888
        %v1890 = vld [vmem:[#allocation4 + $0x140] sm:$0xf]
        %v1891 = vld [vmem:[#allocation4 + $0x144] sm:$0xf]
        %v1892 = vld [vmem:[#allocation4 + $0x148] sm:$0xf]
        %v1893 = vld [vmem:[#allocation4 + $0x14c] sm:$0xf]
        %v1894 = vld [vmem:[#allocation4 + $0x150] sm:$0xf]
        %v1895 = vld [vmem:[#allocation4 + $0x154] sm:$0xf]
        %v1896 = vld [vmem:[#allocation4 + $0x158] sm:$0xf]
        %v1897 = vld [vmem:[#allocation4 + $0x15c] sm:$0xf]
        %v1898 = vld [vmem:[#allocation4 + $0x160] sm:$0xf]
        %v1899 = vld [vmem:[#allocation4 + $0x164] sm:$0xf]
        %v1900 = vld [vmem:[#allocation4 + $0x168] sm:$0xf]
        %v1901 = vld [vmem:[#allocation4 + $0x16c] sm:$0xf]
        %v1902 = vld [vmem:[#allocation4 + $0x170] sm:$0xf]
        %v1903 = vld [vmem:[#allocation4 + $0x174] sm:$0xf]
        %v1904 = vld [vmem:[#allocation4 + $0x178] sm:$0xf]
        %v1905 = vld [vmem:[#allocation4 + $0x17c] sm:$0xf]
        %v1906 = vunpack.c.l.b16 %v1837
        %v1907 = vunpack.c.l.b16 %v1840
        %v1908 = vunpack.c.l.b16 %v1844
        %v1909 = vunpack.c.l.b16 %v1847
        %v1910 = vunpack.c.l.b16 %v1851
        %v1911 = vunpack.c.l.b16 %v1854
        %v1912 = vunpack.c.l.b16 %v1858
        %v1913 = vunpack.c.l.b16 %v1861
        %v1914 = vunpack.c.l.b16 %v1865
        %v1915 = vunpack.c.l.b16 %v1868
        %v1916 = vunpack.c.l.b16 %v1872
        %v1917 = vunpack.c.l.b16 %v1875
        %v1918 = vunpack.c.l.b16 %v1879
        %v1919 = vunpack.c.l.b16 %v1882
        %v1920 = vunpack.c.l.b16 %v1886
        %v1921 = vunpack.c.l.b16 %v1889
        %v1922 = vpack.c.b16 %v1907, %v1906
        %v1923 = vpack.c.b16 %v1909, %v1908
        %v1924 = vpack.c.b16 %v1911, %v1910
        %v1925 = vpack.c.b16 %v1913, %v1912
        %v1926 = vpack.c.b16 %v1915, %v1914
        %v1927 = vpack.c.b16 %v1917, %v1916
        %v1928 = vpack.c.b16 %v1919, %v1918
        %v1929 = vpack.c.b16 %v1921, %v1920
        %v1954 = vunpack.c.l.b16 %v1890
        %v1955 = vunpack.c.l.b16 %v1891
        %v1956 = vunpack.c.l.b16 %v1892
        %v1957 = vunpack.c.l.b16 %v1893
        %v1958 = vunpack.c.l.b16 %v1894
        %v1959 = vunpack.c.l.b16 %v1895
        %v1960 = vunpack.c.l.b16 %v1896
        %v1961 = vunpack.c.l.b16 %v1897
        %v1962 = vunpack.c.l.b16 %v1898
        %v1963 = vunpack.c.l.b16 %v1899
        %v1964 = vunpack.c.l.b16 %v1900
        %v1965 = vunpack.c.l.b16 %v1901
        %v1966 = vunpack.c.l.b16 %v1902
        %v1967 = vunpack.c.l.b16 %v1903
        %v1968 = vunpack.c.l.b16 %v1904
        %v1969 = vunpack.c.l.b16 %v1905
        %v1970 = vpack.c.b16 %v1955, %v1954
        %v1971 = vpack.c.b16 %v1957, %v1956
        %v1972 = vpack.c.b16 %v1959, %v1958
        %v1973 = vpack.c.b16 %v1961, %v1960
        %v1974 = vpack.c.b16 %v1963, %v1962
        %v1975 = vpack.c.b16 %v1965, %v1964
        %v1976 = vpack.c.b16 %v1967, %v1966
        %v1977 = vpack.c.b16 %v1969, %v1968
        %1986 = vmatprep.subr.bf16.mxu0 0
        %1987 = vmatpush1.bf16.msra.mxu0 %v1977
        %1988 = vmatprep.subr.bf16.mxu0 0
        %1989 = vmatpush1.bf16.msra.mxu0 %v1976
        %1990 = vmatprep.subr.bf16.mxu0 0
        %1991 = vmatpush1.bf16.msra.mxu0 %v1975
        %1992 = vmatprep.subr.bf16.mxu0 0
        %1993 = vmatpush1.bf16.msra.mxu0 %v1974
        %1994 = vmatprep.subr.bf16.mxu0 0
        %1995 = vmatpush1.bf16.msra.mxu0 %v1973
        %1996 = vmatprep.subr.bf16.mxu0 0
        %1997 = vmatpush1.bf16.msra.mxu0 %v1972
        %1998 = vmatprep.subr.bf16.mxu0 0
        %1999 = vmatpush1.bf16.msra.mxu0 %v1971
        %2000 = vmatprep.subr.bf16.mxu0 0
        %2001 = vmatpush1.bf16.msra.mxu0 %v1970
        %2002 = vmatprep.subr.bf16.mxu0 0
        %2003 = vmatpush2.bf16.msra.mxu0 0
        %2004 = vmatprep.subr.bf16.mxu0 0
        %2005 = vmatpush2.bf16.msra.mxu0 0
        %2006 = vmatprep.subr.bf16.mxu0 0
        %2007 = vmatpush2.bf16.msra.mxu0 0
        %2008 = vmatprep.subr.bf16.mxu0 0
        %2009 = vmatpush2.bf16.msra.mxu0 0
        %2010 = vmatprep.subr.bf16.mxu0 0
        %2011 = vmatpush2.bf16.msra.mxu0 0
        %2012 = vmatprep.subr.bf16.mxu0 0
        %2013 = vmatpush2.bf16.msra.mxu0 0
        %2014 = vmatprep.subr.bf16.mxu0 0
        %2015 = vmatpush2.bf16.msra.mxu0 0
        %2016 = vmatprep.subr.bf16.mxu0 0
        %2017 = vmatpush2.bf16.msra.mxu0 0
        %2018 = vmatprep.mubr.bf16.mxu0 0
        %2019 = vmatmul.mubr.bf16.gmra.mxu0 %v1922
        %v2020 = vpop.f32.mrf.mxu0
        %v2021 = vadd.f32 0.0, %v2020
        %v2022 = vpop.f32.mrf.mxu0
        %v2023 = vpop.f32.mrf.mxu0
        %v2024 = vadd.f32 0.0, %v2023
        %v2025 = vpop.f32.mrf.mxu0
        %2026 = vmatprep.mubr.bf16.mxu0 0
        %2027 = vmatmul.mubr.bf16.gmra.mxu0 %v1923
        %v2028 = vpop.f32.mrf.mxu0
        %v2029 = vadd.f32 0.0, %v2028
        %v2030 = vpop.f32.mrf.mxu0
        %v2031 = vpop.f32.mrf.mxu0
        %v2032 = vadd.f32 0.0, %v2031
        %v2033 = vpop.f32.mrf.mxu0
        %2034 = vmatprep.mubr.bf16.mxu0 0
        %2035 = vmatmul.mubr.bf16.gmra.mxu0 %v1924
        %v2036 = vpop.f32.mrf.mxu0
        %v2037 = vadd.f32 0.0, %v2036
        %v2038 = vpop.f32.mrf.mxu0
        %v2039 = vpop.f32.mrf.mxu0
        %v2040 = vadd.f32 0.0, %v2039
        %v2041 = vpop.f32.mrf.mxu0
        %2042 = vmatprep.mubr.bf16.mxu0 0
        %2043 = vmatmul.mubr.bf16.gmra.mxu0 %v1925
        %v2044 = vpop.f32.mrf.mxu0
        %v2045 = vadd.f32 0.0, %v2044
        %v2046 = vpop.f32.mrf.mxu0
        %v2047 = vpop.f32.mrf.mxu0
        %v2048 = vadd.f32 0.0, %v2047
        %v2049 = vpop.f32.mrf.mxu0
        %2050 = vmatprep.mubr.bf16.mxu0 0
        %2051 = vmatmul.mubr.bf16.gmra.mxu0 %v1926
        %v2052 = vpop.f32.mrf.mxu0
        %v2053 = vadd.f32 0.0, %v2052
        %v2054 = vpop.f32.mrf.mxu0
        %v2055 = vpop.f32.mrf.mxu0
        %v2056 = vadd.f32 0.0, %v2055
        %v2057 = vpop.f32.mrf.mxu0
        %2058 = vmatprep.mubr.bf16.mxu0 0
        %2059 = vmatmul.mubr.bf16.gmra.mxu0 %v1927
        %v2060 = vpop.f32.mrf.mxu0
        %v2061 = vadd.f32 0.0, %v2060
        %v2062 = vpop.f32.mrf.mxu0
        %v2063 = vpop.f32.mrf.mxu0
        %v2064 = vadd.f32 0.0, %v2063
        %v2065 = vpop.f32.mrf.mxu0
        %2066 = vmatprep.mubr.bf16.mxu0 0
        %2067 = vmatmul.mubr.bf16.gmra.mxu0 %v1928
        %v2068 = vpop.f32.mrf.mxu0
        %v2069 = vadd.f32 0.0, %v2068
        %v2070 = vpop.f32.mrf.mxu0
        %v2071 = vpop.f32.mrf.mxu0
        %v2072 = vadd.f32 0.0, %v2071
        %v2073 = vpop.f32.mrf.mxu0
        %2074 = vmatprep.mubr.bf16.mxu0 0
        %2075 = vmatmul.mubr.bf16.gmra.mxu0 %v1929
        %v2076 = vpop.f32.mrf.mxu0
        %v2077 = vadd.f32 0.0, %v2076
        %v2078 = vpop.f32.mrf.mxu0
        %v2079 = vpop.f32.mrf.mxu0
        %v2080 = vadd.f32 0.0, %v2079
        %v2081 = vpop.f32.mrf.mxu0
        %2082 = vdwg.mxu0
        %v2083 = vadd.f32 %v1786, %v2021
        %v2084 = vadd.f32 %v1787, %v2024
        %v2085 = vadd.f32 %v1788, %v2029
        %v2086 = vadd.f32 %v1789, %v2032
        %v2087 = vadd.f32 %v1790, %v2037
        %v2088 = vadd.f32 %v1791, %v2040
        %v2089 = vadd.f32 %v1792, %v2045
        %v2090 = vadd.f32 %v1793, %v2048
        %v2091 = vadd.f32 %v1794, %v2053
        %v2092 = vadd.f32 %v1795, %v2056
        %v2093 = vadd.f32 %v1796, %v2061
        %v2094 = vadd.f32 %v1797, %v2064
        %v2095 = vadd.f32 %v1798, %v2069
        %v2096 = vadd.f32 %v1799, %v2072
        %v2097 = vadd.f32 %v1800, %v2077
        %v2098 = vadd.f32 %v1801, %v2080
        %s2099 = sadd.s32 6, %s217
        %s2100 = smul.addr %s2099, 4
        %s2101 = scalar_lea.vmem [#allocation2], %s2100
        %v2102 = vld [vmem:[%s2101] sm:$0xf]
        %v2103 = vld [vmem:[%s2101 + $0x4] sm:$0xf]
        %v2104 = vld [vmem:[%s2101 + $0xc] sm:$0xf]
        %v2105 = vld [vmem:[%s2101 + $0x10] sm:$0xf]
        %v2106 = vld [vmem:[%s2101 + $0x18] sm:$0xf]
        %v2107 = vld [vmem:[%s2101 + $0x1c] sm:$0xf]
        %v2108 = vld [vmem:[%s2101 + $0x24] sm:$0xf]
        %v2109 = vld [vmem:[%s2101 + $0x28] sm:$0xf]
        %v2110 = vld [vmem:[%s2101 + $0x30] sm:$0xf]
        %v2111 = vld [vmem:[%s2101 + $0x34] sm:$0xf]
        %v2112 = vld [vmem:[%s2101 + $0x3c] sm:$0xf]
        %v2113 = vld [vmem:[%s2101 + $0x40] sm:$0xf]
        %v2114 = vld [vmem:[%s2101 + $0x48] sm:$0xf]
        %v2115 = vld [vmem:[%s2101 + $0x4c] sm:$0xf]
        %v2116 = vld [vmem:[%s2101 + $0x54] sm:$0xf]
        %v2117 = vld [vmem:[%s2101 + $0x58] sm:$0xf]
        %v2118 = vld [vmem:[#allocation4 + $0x180] sm:$0xf]
        %v2119 = vld [vmem:[#allocation4 + $0x184] sm:$0xf]
        %v2120 = vld [vmem:[#allocation4 + $0x188] sm:$0xf]
        %v2121 = vld [vmem:[#allocation4 + $0x18c] sm:$0xf]
        %v2122 = vld [vmem:[#allocation4 + $0x190] sm:$0xf]
        %v2123 = vld [vmem:[#allocation4 + $0x194] sm:$0xf]
        %v2124 = vld [vmem:[#allocation4 + $0x198] sm:$0xf]
        %v2125 = vld [vmem:[#allocation4 + $0x19c] sm:$0xf]
        %v2126 = vld [vmem:[#allocation4 + $0x1a0] sm:$0xf]
        %v2127 = vld [vmem:[#allocation4 + $0x1a4] sm:$0xf]
        %v2128 = vld [vmem:[#allocation4 + $0x1a8] sm:$0xf]
        %v2129 = vld [vmem:[#allocation4 + $0x1ac] sm:$0xf]
        %v2130 = vld [vmem:[#allocation4 + $0x1b0] sm:$0xf]
        %v2131 = vld [vmem:[#allocation4 + $0x1b4] sm:$0xf]
        %v2132 = vld [vmem:[#allocation4 + $0x1b8] sm:$0xf]
        %v2133 = vld [vmem:[#allocation4 + $0x1bc] sm:$0xf]
        %v2150 = vunpack.c.l.b16 %v2102
        %v2151 = vunpack.c.l.b16 %v2103
        %v2152 = vunpack.c.l.b16 %v2104
        %v2153 = vunpack.c.l.b16 %v2105
        %v2154 = vunpack.c.l.b16 %v2106
        %v2155 = vunpack.c.l.b16 %v2107
        %v2156 = vunpack.c.l.b16 %v2108
        %v2157 = vunpack.c.l.b16 %v2109
        %v2158 = vunpack.c.l.b16 %v2110
        %v2159 = vunpack.c.l.b16 %v2111
        %v2160 = vunpack.c.l.b16 %v2112
        %v2161 = vunpack.c.l.b16 %v2113
        %v2162 = vunpack.c.l.b16 %v2114
        %v2163 = vunpack.c.l.b16 %v2115
        %v2164 = vunpack.c.l.b16 %v2116
        %v2165 = vunpack.c.l.b16 %v2117
        %v2166 = vpack.c.b16 %v2151, %v2150
        %v2167 = vpack.c.b16 %v2153, %v2152
        %v2168 = vpack.c.b16 %v2155, %v2154
        %v2169 = vpack.c.b16 %v2157, %v2156
        %v2170 = vpack.c.b16 %v2159, %v2158
        %v2171 = vpack.c.b16 %v2161, %v2160
        %v2172 = vpack.c.b16 %v2163, %v2162
        %v2173 = vpack.c.b16 %v2165, %v2164
        %v2198 = vunpack.c.l.b16 %v2118
        %v2199 = vunpack.c.l.b16 %v2119
        %v2200 = vunpack.c.l.b16 %v2120
        %v2201 = vunpack.c.l.b16 %v2121
        %v2202 = vunpack.c.l.b16 %v2122
        %v2203 = vunpack.c.l.b16 %v2123
        %v2204 = vunpack.c.l.b16 %v2124
        %v2205 = vunpack.c.l.b16 %v2125
        %v2206 = vunpack.c.l.b16 %v2126
        %v2207 = vunpack.c.l.b16 %v2127
        %v2208 = vunpack.c.l.b16 %v2128
        %v2209 = vunpack.c.l.b16 %v2129
        %v2210 = vunpack.c.l.b16 %v2130
        %v2211 = vunpack.c.l.b16 %v2131
        %v2212 = vunpack.c.l.b16 %v2132
        %v2213 = vunpack.c.l.b16 %v2133
        %v2214 = vpack.c.b16 %v2199, %v2198
        %v2215 = vpack.c.b16 %v2201, %v2200
        %v2216 = vpack.c.b16 %v2203, %v2202
        %v2217 = vpack.c.b16 %v2205, %v2204
        %v2218 = vpack.c.b16 %v2207, %v2206
        %v2219 = vpack.c.b16 %v2209, %v2208
        %v2220 = vpack.c.b16 %v2211, %v2210
        %v2221 = vpack.c.b16 %v2213, %v2212
        %2230 = vmatprep.subr.bf16.mxu0 0
        %2231 = vmatpush1.bf16.msra.mxu0 %v2221
        %2232 = vmatprep.subr.bf16.mxu0 0
        %2233 = vmatpush1.bf16.msra.mxu0 %v2220
        %2234 = vmatprep.subr.bf16.mxu0 0
        %2235 = vmatpush1.bf16.msra.mxu0 %v2219
        %2236 = vmatprep.subr.bf16.mxu0 0
        %2237 = vmatpush1.bf16.msra.mxu0 %v2218
        %2238 = vmatprep.subr.bf16.mxu0 0
        %2239 = vmatpush1.bf16.msra.mxu0 %v2217
        %2240 = vmatprep.subr.bf16.mxu0 0
        %2241 = vmatpush1.bf16.msra.mxu0 %v2216
        %2242 = vmatprep.subr.bf16.mxu0 0
        %2243 = vmatpush1.bf16.msra.mxu0 %v2215
        %2244 = vmatprep.subr.bf16.mxu0 0
        %2245 = vmatpush1.bf16.msra.mxu0 %v2214
        %2246 = vmatprep.subr.bf16.mxu0 0
        %2247 = vmatpush2.bf16.msra.mxu0 0
        %2248 = vmatprep.subr.bf16.mxu0 0
        %2249 = vmatpush2.bf16.msra.mxu0 0
        %2250 = vmatprep.subr.bf16.mxu0 0
        %2251 = vmatpush2.bf16.msra.mxu0 0
        %2252 = vmatprep.subr.bf16.mxu0 0
        %2253 = vmatpush2.bf16.msra.mxu0 0
        %2254 = vmatprep.subr.bf16.mxu0 0
        %2255 = vmatpush2.bf16.msra.mxu0 0
        %2256 = vmatprep.subr.bf16.mxu0 0
        %2257 = vmatpush2.bf16.msra.mxu0 0
        %2258 = vmatprep.subr.bf16.mxu0 0
        %2259 = vmatpush2.bf16.msra.mxu0 0
        %2260 = vmatprep.subr.bf16.mxu0 0
        %2261 = vmatpush2.bf16.msra.mxu0 0
        %2262 = vmatprep.mubr.bf16.mxu0 0
        %2263 = vmatmul.mubr.bf16.gmra.mxu0 %v2166
        %v2264 = vpop.f32.mrf.mxu0
        %v2265 = vadd.f32 0.0, %v2264
        %v2266 = vpop.f32.mrf.mxu0
        %v2267 = vpop.f32.mrf.mxu0
        %v2268 = vadd.f32 0.0, %v2267
        %v2269 = vpop.f32.mrf.mxu0
        %2270 = vmatprep.mubr.bf16.mxu0 0
        %2271 = vmatmul.mubr.bf16.gmra.mxu0 %v2167
        %v2272 = vpop.f32.mrf.mxu0
        %v2273 = vadd.f32 0.0, %v2272
        %v2274 = vpop.f32.mrf.mxu0
        %v2275 = vpop.f32.mrf.mxu0
        %v2276 = vadd.f32 0.0, %v2275
        %v2277 = vpop.f32.mrf.mxu0
        %2278 = vmatprep.mubr.bf16.mxu0 0
        %2279 = vmatmul.mubr.bf16.gmra.mxu0 %v2168
        %v2280 = vpop.f32.mrf.mxu0
        %v2281 = vadd.f32 0.0, %v2280
        %v2282 = vpop.f32.mrf.mxu0
        %v2283 = vpop.f32.mrf.mxu0
        %v2284 = vadd.f32 0.0, %v2283
        %v2285 = vpop.f32.mrf.mxu0
        %2286 = vmatprep.mubr.bf16.mxu0 0
        %2287 = vmatmul.mubr.bf16.gmra.mxu0 %v2169
        %v2288 = vpop.f32.mrf.mxu0
        %v2289 = vadd.f32 0.0, %v2288
        %v2290 = vpop.f32.mrf.mxu0
        %v2291 = vpop.f32.mrf.mxu0
        %v2292 = vadd.f32 0.0, %v2291
        %v2293 = vpop.f32.mrf.mxu0
        %2294 = vmatprep.mubr.bf16.mxu0 0
        %2295 = vmatmul.mubr.bf16.gmra.mxu0 %v2170
        %v2296 = vpop.f32.mrf.mxu0
        %v2297 = vadd.f32 0.0, %v2296
        %v2298 = vpop.f32.mrf.mxu0
        %v2299 = vpop.f32.mrf.mxu0
        %v2300 = vadd.f32 0.0, %v2299
        %v2301 = vpop.f32.mrf.mxu0
        %2302 = vmatprep.mubr.bf16.mxu0 0
        %2303 = vmatmul.mubr.bf16.gmra.mxu0 %v2171
        %v2304 = vpop.f32.mrf.mxu0
        %v2305 = vadd.f32 0.0, %v2304
        %v2306 = vpop.f32.mrf.mxu0
        %v2307 = vpop.f32.mrf.mxu0
        %v2308 = vadd.f32 0.0, %v2307
        %v2309 = vpop.f32.mrf.mxu0
        %2310 = vmatprep.mubr.bf16.mxu0 0
        %2311 = vmatmul.mubr.bf16.gmra.mxu0 %v2172
        %v2312 = vpop.f32.mrf.mxu0
        %v2313 = vadd.f32 0.0, %v2312
        %v2314 = vpop.f32.mrf.mxu0
        %v2315 = vpop.f32.mrf.mxu0
        %v2316 = vadd.f32 0.0, %v2315
        %v2317 = vpop.f32.mrf.mxu0
        %2318 = vmatprep.mubr.bf16.mxu0 0
        %2319 = vmatmul.mubr.bf16.gmra.mxu0 %v2173
        %v2320 = vpop.f32.mrf.mxu0
        %v2321 = vadd.f32 0.0, %v2320
        %v2322 = vpop.f32.mrf.mxu0
        %v2323 = vpop.f32.mrf.mxu0
        %v2324 = vadd.f32 0.0, %v2323
        %v2325 = vpop.f32.mrf.mxu0
        %2326 = vdwg.mxu0
        %v2327 = vadd.f32 %v2083, %v2265
        %v2328 = vadd.f32 %v2084, %v2268
        %v2329 = vadd.f32 %v2085, %v2273
        %v2330 = vadd.f32 %v2086, %v2276
        %v2331 = vadd.f32 %v2087, %v2281
        %v2332 = vadd.f32 %v2088, %v2284
        %v2333 = vadd.f32 %v2089, %v2289
        %v2334 = vadd.f32 %v2090, %v2292
        %v2335 = vadd.f32 %v2091, %v2297
        %v2336 = vadd.f32 %v2092, %v2300
        %v2337 = vadd.f32 %v2093, %v2305
        %v2338 = vadd.f32 %v2094, %v2308
        %v2339 = vadd.f32 %v2095, %v2313
        %v2340 = vadd.f32 %v2096, %v2316
        %v2341 = vadd.f32 %v2097, %v2321
        %v2342 = vadd.f32 %v2098, %v2324
        %v2343 = vld [vmem:[%s2101] sm:$0xf]
        %v2344 = vld [vmem:[%s2101 + $0x4] sm:$0xf]
        %v2345 = vld [vmem:[%s2101 + $0x8] sm:$0x1]
        %v2346 = vld [vmem:[%s2101 + $0xc] sm:$0xf]
        %v2347 = vld [vmem:[%s2101 + $0x10] sm:$0xf]
        %v2348 = vld [vmem:[%s2101 + $0x14] sm:$0x1]
        %v2349 = vld [vmem:[%s2101 + $0x18] sm:$0xf]
        %v2350 = vld [vmem:[%s2101 + $0x1c] sm:$0xf]
        %v2351 = vld [vmem:[%s2101 + $0x20] sm:$0x1]
        %v2352 = vld [vmem:[%s2101 + $0x24] sm:$0xf]
        %v2353 = vld [vmem:[%s2101 + $0x28] sm:$0xf]
        %v2354 = vld [vmem:[%s2101 + $0x2c] sm:$0x1]
        %v2355 = vld [vmem:[%s2101 + $0x30] sm:$0xf]
        %v2356 = vld [vmem:[%s2101 + $0x34] sm:$0xf]
        %v2357 = vld [vmem:[%s2101 + $0x38] sm:$0x1]
        %v2358 = vld [vmem:[%s2101 + $0x3c] sm:$0xf]
        %v2359 = vld [vmem:[%s2101 + $0x40] sm:$0xf]
        %v2360 = vld [vmem:[%s2101 + $0x44] sm:$0x1]
        %v2361 = vld [vmem:[%s2101 + $0x48] sm:$0xf]
        %v2362 = vld [vmem:[%s2101 + $0x4c] sm:$0xf]
        %v2363 = vld [vmem:[%s2101 + $0x50] sm:$0x1]
        %v2364 = vld [vmem:[%s2101 + $0x54] sm:$0xf]
        %v2365 = vld [vmem:[%s2101 + $0x58] sm:$0xf]
        %v2366 = vld [vmem:[%s2101 + $0x5c] sm:$0x1]
        %v2368 = vshrl.u32 %v2343, 16
        %v2370 = vrot.slane %v2368, 4
        %v2371 = vshll.u32 %v2343, 16
        %v2373 = vrot.slane %v2371, 5
        %v2374 = vor.u32 %v2370, %v2373
        %v2375 = vrot.slane %v2374, 4
        %v2377 = vshll.u32 %v2344, 16
        %v2379 = vrot.slane %v2377, 5
        %v2380 = vsel %vm262, %v2375, %v2379
        %v2381 = vshrl.u32 %v2344, 16
        %v2383 = vrot.slane %v2381, 4
        %v2384 = vor.u32 %v2383, %v2379
        %v2385 = vrot.slane %v2384, 4
        %v2387 = vshll.u32 %v2345, 16
        %v2389 = vrot.slane %v2387, 5
        %v2390 = vsel %vm262, %v2385, %v2389
        %v2392 = vshrl.u32 %v2346, 16
        %v2394 = vrot.slane %v2392, 4
        %v2395 = vshll.u32 %v2346, 16
        %v2397 = vrot.slane %v2395, 5
        %v2398 = vor.u32 %v2394, %v2397
        %v2399 = vrot.slane %v2398, 4
        %v2401 = vshll.u32 %v2347, 16
        %v2403 = vrot.slane %v2401, 5
        %v2404 = vsel %vm262, %v2399, %v2403
        %v2405 = vshrl.u32 %v2347, 16
        %v2407 = vrot.slane %v2405, 4
        %v2408 = vor.u32 %v2407, %v2403
        %v2409 = vrot.slane %v2408, 4
        %v2411 = vshll.u32 %v2348, 16
        %v2413 = vrot.slane %v2411, 5
        %v2414 = vsel %vm262, %v2409, %v2413
        %v2416 = vshrl.u32 %v2349, 16
        %v2418 = vrot.slane %v2416, 4
        %v2419 = vshll.u32 %v2349, 16
        %v2421 = vrot.slane %v2419, 5
        %v2422 = vor.u32 %v2418, %v2421
        %v2423 = vrot.slane %v2422, 4
        %v2425 = vshll.u32 %v2350, 16
        %v2427 = vrot.slane %v2425, 5
        %v2428 = vsel %vm262, %v2423, %v2427
        %v2429 = vshrl.u32 %v2350, 16
        %v2431 = vrot.slane %v2429, 4
        %v2432 = vor.u32 %v2431, %v2427
        %v2433 = vrot.slane %v2432, 4
        %v2435 = vshll.u32 %v2351, 16
        %v2437 = vrot.slane %v2435, 5
        %v2438 = vsel %vm262, %v2433, %v2437
        %v2440 = vshrl.u32 %v2352, 16
        %v2442 = vrot.slane %v2440, 4
        %v2443 = vshll.u32 %v2352, 16
        %v2445 = vrot.slane %v2443, 5
        %v2446 = vor.u32 %v2442, %v2445
        %v2447 = vrot.slane %v2446, 4
        %v2449 = vshll.u32 %v2353, 16
        %v2451 = vrot.slane %v2449, 5
        %v2452 = vsel %vm262, %v2447, %v2451
        %v2453 = vshrl.u32 %v2353, 16
        %v2455 = vrot.slane %v2453, 4
        %v2456 = vor.u32 %v2455, %v2451
        %v2457 = vrot.slane %v2456, 4
        %v2459 = vshll.u32 %v2354, 16
        %v2461 = vrot.slane %v2459, 5
        %v2462 = vsel %vm262, %v2457, %v2461
        %v2464 = vshrl.u32 %v2355, 16
        %v2466 = vrot.slane %v2464, 4
        %v2467 = vshll.u32 %v2355, 16
        %v2469 = vrot.slane %v2467, 5
        %v2470 = vor.u32 %v2466, %v2469
        %v2471 = vrot.slane %v2470, 4
        %v2473 = vshll.u32 %v2356, 16
        %v2475 = vrot.slane %v2473, 5
        %v2476 = vsel %vm262, %v2471, %v2475
        %v2477 = vshrl.u32 %v2356, 16
        %v2479 = vrot.slane %v2477, 4
        %v2480 = vor.u32 %v2479, %v2475
        %v2481 = vrot.slane %v2480, 4
        %v2483 = vshll.u32 %v2357, 16
        %v2485 = vrot.slane %v2483, 5
        %v2486 = vsel %vm262, %v2481, %v2485
        %v2488 = vshrl.u32 %v2358, 16
        %v2490 = vrot.slane %v2488, 4
        %v2491 = vshll.u32 %v2358, 16
        %v2493 = vrot.slane %v2491, 5
        %v2494 = vor.u32 %v2490, %v2493
        %v2495 = vrot.slane %v2494, 4
        %v2497 = vshll.u32 %v2359, 16
        %v2499 = vrot.slane %v2497, 5
        %v2500 = vsel %vm262, %v2495, %v2499
        %v2501 = vshrl.u32 %v2359, 16
        %v2503 = vrot.slane %v2501, 4
        %v2504 = vor.u32 %v2503, %v2499
        %v2505 = vrot.slane %v2504, 4
        %v2507 = vshll.u32 %v2360, 16
        %v2509 = vrot.slane %v2507, 5
        %v2510 = vsel %vm262, %v2505, %v2509
        %v2512 = vshrl.u32 %v2361, 16
        %v2514 = vrot.slane %v2512, 4
        %v2515 = vshll.u32 %v2361, 16
        %v2517 = vrot.slane %v2515, 5
        %v2518 = vor.u32 %v2514, %v2517
        %v2519 = vrot.slane %v2518, 4
        %v2521 = vshll.u32 %v2362, 16
        %v2523 = vrot.slane %v2521, 5
        %v2524 = vsel %vm262, %v2519, %v2523
        %v2525 = vshrl.u32 %v2362, 16
        %v2527 = vrot.slane %v2525, 4
        %v2528 = vor.u32 %v2527, %v2523
        %v2529 = vrot.slane %v2528, 4
        %v2531 = vshll.u32 %v2363, 16
        %v2533 = vrot.slane %v2531, 5
        %v2534 = vsel %vm262, %v2529, %v2533
        %v2536 = vshrl.u32 %v2364, 16
        %v2538 = vrot.slane %v2536, 4
        %v2539 = vshll.u32 %v2364, 16
        %v2541 = vrot.slane %v2539, 5
        %v2542 = vor.u32 %v2538, %v2541
        %v2543 = vrot.slane %v2542, 4
        %v2545 = vshll.u32 %v2365, 16
        %v2547 = vrot.slane %v2545, 5
        %v2548 = vsel %vm262, %v2543, %v2547
        %v2549 = vshrl.u32 %v2365, 16
        %v2551 = vrot.slane %v2549, 4
        %v2552 = vor.u32 %v2551, %v2547
        %v2553 = vrot.slane %v2552, 4
        %v2555 = vshll.u32 %v2366, 16
        %v2557 = vrot.slane %v2555, 5
        %v2558 = vsel %vm262, %v2553, %v2557
        %v2559 = vld [vmem:[#allocation4 + $0x1c0] sm:$0xf]
        %v2560 = vld [vmem:[#allocation4 + $0x1c4] sm:$0xf]
        %v2561 = vld [vmem:[#allocation4 + $0x1c8] sm:$0xf]
        %v2562 = vld [vmem:[#allocation4 + $0x1cc] sm:$0xf]
        %v2563 = vld [vmem:[#allocation4 + $0x1d0] sm:$0xf]
        %v2564 = vld [vmem:[#allocation4 + $0x1d4] sm:$0xf]
        %v2565 = vld [vmem:[#allocation4 + $0x1d8] sm:$0xf]
        %v2566 = vld [vmem:[#allocation4 + $0x1dc] sm:$0xf]
        %v2567 = vld [vmem:[#allocation4 + $0x1e0] sm:$0xf]
        %v2568 = vld [vmem:[#allocation4 + $0x1e4] sm:$0xf]
        %v2569 = vld [vmem:[#allocation4 + $0x1e8] sm:$0xf]
        %v2570 = vld [vmem:[#allocation4 + $0x1ec] sm:$0xf]
        %v2571 = vld [vmem:[#allocation4 + $0x1f0] sm:$0xf]
        %v2572 = vld [vmem:[#allocation4 + $0x1f4] sm:$0xf]
        %v2573 = vld [vmem:[#allocation4 + $0x1f8] sm:$0xf]
        %v2574 = vld [vmem:[#allocation4 + $0x1fc] sm:$0xf]
        %v2575 = vunpack.c.l.b16 %v2380
        %v2576 = vunpack.c.l.b16 %v2390
        %v2577 = vunpack.c.l.b16 %v2404
        %v2578 = vunpack.c.l.b16 %v2414
        %v2579 = vunpack.c.l.b16 %v2428
        %v2580 = vunpack.c.l.b16 %v2438
        %v2581 = vunpack.c.l.b16 %v2452
        %v2582 = vunpack.c.l.b16 %v2462
        %v2583 = vunpack.c.l.b16 %v2476
        %v2584 = vunpack.c.l.b16 %v2486
        %v2585 = vunpack.c.l.b16 %v2500
        %v2586 = vunpack.c.l.b16 %v2510
        %v2587 = vunpack.c.l.b16 %v2524
        %v2588 = vunpack.c.l.b16 %v2534
        %v2589 = vunpack.c.l.b16 %v2548
        %v2590 = vunpack.c.l.b16 %v2558
        %v2591 = vpack.c.b16 %v2576, %v2575
        %v2592 = vpack.c.b16 %v2578, %v2577
        %v2593 = vpack.c.b16 %v2580, %v2579
        %v2594 = vpack.c.b16 %v2582, %v2581
        %v2595 = vpack.c.b16 %v2584, %v2583
        %v2596 = vpack.c.b16 %v2586, %v2585
        %v2597 = vpack.c.b16 %v2588, %v2587
        %v2598 = vpack.c.b16 %v2590, %v2589
        %v2623 = vunpack.c.l.b16 %v2559
        %v2624 = vunpack.c.l.b16 %v2560
        %v2625 = vunpack.c.l.b16 %v2561
        %v2626 = vunpack.c.l.b16 %v2562
        %v2627 = vunpack.c.l.b16 %v2563
        %v2628 = vunpack.c.l.b16 %v2564
        %v2629 = vunpack.c.l.b16 %v2565
        %v2630 = vunpack.c.l.b16 %v2566
        %v2631 = vunpack.c.l.b16 %v2567
        %v2632 = vunpack.c.l.b16 %v2568
        %v2633 = vunpack.c.l.b16 %v2569
        %v2634 = vunpack.c.l.b16 %v2570
        %v2635 = vunpack.c.l.b16 %v2571
        %v2636 = vunpack.c.l.b16 %v2572
        %v2637 = vunpack.c.l.b16 %v2573
        %v2638 = vunpack.c.l.b16 %v2574
        %v2639 = vpack.c.b16 %v2624, %v2623
        %v2640 = vpack.c.b16 %v2626, %v2625
        %v2641 = vpack.c.b16 %v2628, %v2627
        %v2642 = vpack.c.b16 %v2630, %v2629
        %v2643 = vpack.c.b16 %v2632, %v2631
        %v2644 = vpack.c.b16 %v2634, %v2633
        %v2645 = vpack.c.b16 %v2636, %v2635
        %v2646 = vpack.c.b16 %v2638, %v2637
        %2655 = vmatprep.subr.bf16.mxu0 0
        %2656 = vmatpush1.bf16.msra.mxu0 %v2646
        %2657 = vmatprep.subr.bf16.mxu0 0
        %2658 = vmatpush1.bf16.msra.mxu0 %v2645
        %2659 = vmatprep.subr.bf16.mxu0 0
        %2660 = vmatpush1.bf16.msra.mxu0 %v2644
        %2661 = vmatprep.subr.bf16.mxu0 0
        %2662 = vmatpush1.bf16.msra.mxu0 %v2643
        %2663 = vmatprep.subr.bf16.mxu0 0
        %2664 = vmatpush1.bf16.msra.mxu0 %v2642
        %2665 = vmatprep.subr.bf16.mxu0 0
        %2666 = vmatpush1.bf16.msra.mxu0 %v2641
        %2667 = vmatprep.subr.bf16.mxu0 0
        %2668 = vmatpush1.bf16.msra.mxu0 %v2640
        %2669 = vmatprep.subr.bf16.mxu0 0
        %2670 = vmatpush1.bf16.msra.mxu0 %v2639
        %2671 = vmatprep.subr.bf16.mxu0 0
        %2672 = vmatpush2.bf16.msra.mxu0 0
        %2673 = vmatprep.subr.bf16.mxu0 0
        %2674 = vmatpush2.bf16.msra.mxu0 0
        %2675 = vmatprep.subr.bf16.mxu0 0
        %2676 = vmatpush2.bf16.msra.mxu0 0
        %2677 = vmatprep.subr.bf16.mxu0 0
        %2678 = vmatpush2.bf16.msra.mxu0 0
        %2679 = vmatprep.subr.bf16.mxu0 0
        %2680 = vmatpush2.bf16.msra.mxu0 0
        %2681 = vmatprep.subr.bf16.mxu0 0
        %2682 = vmatpush2.bf16.msra.mxu0 0
        %2683 = vmatprep.subr.bf16.mxu0 0
        %2684 = vmatpush2.bf16.msra.mxu0 0
        %2685 = vmatprep.subr.bf16.mxu0 0
        %2686 = vmatpush2.bf16.msra.mxu0 0
        %2687 = vmatprep.mubr.bf16.mxu0 0
        %2688 = vmatmul.mubr.bf16.gmra.mxu0 %v2591
        %v2689 = vpop.f32.mrf.mxu0
        %v2690 = vadd.f32 0.0, %v2689
        %v2691 = vpop.f32.mrf.mxu0
        %v2692 = vpop.f32.mrf.mxu0
        %v2693 = vadd.f32 0.0, %v2692
        %v2694 = vpop.f32.mrf.mxu0
        %2695 = vmatprep.mubr.bf16.mxu0 0
        %2696 = vmatmul.mubr.bf16.gmra.mxu0 %v2592
        %v2697 = vpop.f32.mrf.mxu0
        %v2698 = vadd.f32 0.0, %v2697
        %v2699 = vpop.f32.mrf.mxu0
        %v2700 = vpop.f32.mrf.mxu0
        %v2701 = vadd.f32 0.0, %v2700
        %v2702 = vpop.f32.mrf.mxu0
        %2703 = vmatprep.mubr.bf16.mxu0 0
        %2704 = vmatmul.mubr.bf16.gmra.mxu0 %v2593
        %v2705 = vpop.f32.mrf.mxu0
        %v2706 = vadd.f32 0.0, %v2705
        %v2707 = vpop.f32.mrf.mxu0
        %v2708 = vpop.f32.mrf.mxu0
        %v2709 = vadd.f32 0.0, %v2708
        %v2710 = vpop.f32.mrf.mxu0
        %2711 = vmatprep.mubr.bf16.mxu0 0
        %2712 = vmatmul.mubr.bf16.gmra.mxu0 %v2594
        %v2713 = vpop.f32.mrf.mxu0
        %v2714 = vadd.f32 0.0, %v2713
        %v2715 = vpop.f32.mrf.mxu0
        %v2716 = vpop.f32.mrf.mxu0
        %v2717 = vadd.f32 0.0, %v2716
        %v2718 = vpop.f32.mrf.mxu0
        %2719 = vmatprep.mubr.bf16.mxu0 0
        %2720 = vmatmul.mubr.bf16.gmra.mxu0 %v2595
        %v2721 = vpop.f32.mrf.mxu0
        %v2722 = vadd.f32 0.0, %v2721
        %v2723 = vpop.f32.mrf.mxu0
        %v2724 = vpop.f32.mrf.mxu0
        %v2725 = vadd.f32 0.0, %v2724
        %v2726 = vpop.f32.mrf.mxu0
        %2727 = vmatprep.mubr.bf16.mxu0 0
        %2728 = vmatmul.mubr.bf16.gmra.mxu0 %v2596
        %v2729 = vpop.f32.mrf.mxu0
        %v2730 = vadd.f32 0.0, %v2729
        %v2731 = vpop.f32.mrf.mxu0
        %v2732 = vpop.f32.mrf.mxu0
        %v2733 = vadd.f32 0.0, %v2732
        %v2734 = vpop.f32.mrf.mxu0
        %2735 = vmatprep.mubr.bf16.mxu0 0
        %2736 = vmatmul.mubr.bf16.gmra.mxu0 %v2597
        %v2737 = vpop.f32.mrf.mxu0
        %v2738 = vadd.f32 0.0, %v2737
        %v2739 = vpop.f32.mrf.mxu0
        %v2740 = vpop.f32.mrf.mxu0
        %v2741 = vadd.f32 0.0, %v2740
        %v2742 = vpop.f32.mrf.mxu0
        %2743 = vmatprep.mubr.bf16.mxu0 0
        %2744 = vmatmul.mubr.bf16.gmra.mxu0 %v2598
        %v2745 = vpop.f32.mrf.mxu0
        %v2746 = vadd.f32 0.0, %v2745
        %v2747 = vpop.f32.mrf.mxu0
        %v2748 = vpop.f32.mrf.mxu0
        %v2749 = vadd.f32 0.0, %v2748
        %v2750 = vpop.f32.mrf.mxu0
        %2751 = vdwg.mxu0
        %v2752 = vadd.f32 %v2327, %v2690
        %v2753 = vadd.f32 %v2328, %v2693
        %v2754 = vadd.f32 %v2329, %v2698
        %v2755 = vadd.f32 %v2330, %v2701
        %v2756 = vadd.f32 %v2331, %v2706
        %v2757 = vadd.f32 %v2332, %v2709
        %v2758 = vadd.f32 %v2333, %v2714
        %v2759 = vadd.f32 %v2334, %v2717
        %v2760 = vadd.f32 %v2335, %v2722
        %v2761 = vadd.f32 %v2336, %v2725
        %v2762 = vadd.f32 %v2337, %v2730
        %v2763 = vadd.f32 %v2338, %v2733
        %v2764 = vadd.f32 %v2339, %v2738
        %v2765 = vadd.f32 %v2340, %v2741
        %v2766 = vadd.f32 %v2341, %v2746
        %v2767 = vadd.f32 %v2342, %v2749
        %v2768 = vld [vmem:[%s2101] sm:$0xe]
        %v2769 = vld [vmem:[%s2101 + $0xc] sm:$0xe]
        %v2770 = vld [vmem:[%s2101 + $0x18] sm:$0xe]
        %v2771 = vld [vmem:[%s2101 + $0x24] sm:$0xe]
        %v2772 = vld [vmem:[%s2101 + $0x30] sm:$0xe]
        %v2773 = vld [vmem:[%s2101 + $0x3c] sm:$0xe]
        %v2774 = vld [vmem:[%s2101 + $0x48] sm:$0xe]
        %v2775 = vld [vmem:[%s2101 + $0x54] sm:$0xe]
        %v2800 = vrot.slane %v2768, 5
        %v2801 = vrot.slane %v2800, 4
        %v2802 = vrot.slane %v2344, 5
        %v2803 = vsel %vm867, %v2801, %v2802
        %v2804 = vrot.slane %v2802, 4
        %v2805 = vrot.slane %v2345, 5
        %v2806 = vsel %vm867, %v2804, %v2805
        %v2807 = vrot.slane %v2769, 5
        %v2808 = vrot.slane %v2807, 4
        %v2809 = vrot.slane %v2347, 5
        %v2810 = vsel %vm867, %v2808, %v2809
        %v2811 = vrot.slane %v2809, 4
        %v2812 = vrot.slane %v2348, 5
        %v2813 = vsel %vm867, %v2811, %v2812
        %v2814 = vrot.slane %v2770, 5
        %v2815 = vrot.slane %v2814, 4
        %v2816 = vrot.slane %v2350, 5
        %v2817 = vsel %vm867, %v2815, %v2816
        %v2818 = vrot.slane %v2816, 4
        %v2819 = vrot.slane %v2351, 5
        %v2820 = vsel %vm867, %v2818, %v2819
        %v2821 = vrot.slane %v2771, 5
        %v2822 = vrot.slane %v2821, 4
        %v2823 = vrot.slane %v2353, 5
        %v2824 = vsel %vm867, %v2822, %v2823
        %v2825 = vrot.slane %v2823, 4
        %v2826 = vrot.slane %v2354, 5
        %v2827 = vsel %vm867, %v2825, %v2826
        %v2828 = vrot.slane %v2772, 5
        %v2829 = vrot.slane %v2828, 4
        %v2830 = vrot.slane %v2356, 5
        %v2831 = vsel %vm867, %v2829, %v2830
        %v2832 = vrot.slane %v2830, 4
        %v2833 = vrot.slane %v2357, 5
        %v2834 = vsel %vm867, %v2832, %v2833
        %v2835 = vrot.slane %v2773, 5
        %v2836 = vrot.slane %v2835, 4
        %v2837 = vrot.slane %v2359, 5
        %v2838 = vsel %vm867, %v2836, %v2837
        %v2839 = vrot.slane %v2837, 4
        %v2840 = vrot.slane %v2360, 5
        %v2841 = vsel %vm867, %v2839, %v2840
        %v2842 = vrot.slane %v2774, 5
        %v2843 = vrot.slane %v2842, 4
        %v2844 = vrot.slane %v2362, 5
        %v2845 = vsel %vm867, %v2843, %v2844
        %v2846 = vrot.slane %v2844, 4
        %v2847 = vrot.slane %v2363, 5
        %v2848 = vsel %vm867, %v2846, %v2847
        %v2849 = vrot.slane %v2775, 5
        %v2850 = vrot.slane %v2849, 4
        %v2851 = vrot.slane %v2365, 5
        %v2852 = vsel %vm867, %v2850, %v2851
        %v2853 = vrot.slane %v2851, 4
        %v2854 = vrot.slane %v2366, 5
        %v2855 = vsel %vm867, %v2853, %v2854
        %v2856 = vld [vmem:[#allocation4 + $0x200] sm:$0xf]
        %v2857 = vld [vmem:[#allocation4 + $0x204] sm:$0xf]
        %v2858 = vld [vmem:[#allocation4 + $0x208] sm:$0xf]
        %v2859 = vld [vmem:[#allocation4 + $0x20c] sm:$0xf]
        %v2860 = vld [vmem:[#allocation4 + $0x210] sm:$0xf]
        %v2861 = vld [vmem:[#allocation4 + $0x214] sm:$0xf]
        %v2862 = vld [vmem:[#allocation4 + $0x218] sm:$0xf]
        %v2863 = vld [vmem:[#allocation4 + $0x21c] sm:$0xf]
        %v2864 = vld [vmem:[#allocation4 + $0x220] sm:$0xf]
        %v2865 = vld [vmem:[#allocation4 + $0x224] sm:$0xf]
        %v2866 = vld [vmem:[#allocation4 + $0x228] sm:$0xf]
        %v2867 = vld [vmem:[#allocation4 + $0x22c] sm:$0xf]
        %v2868 = vld [vmem:[#allocation4 + $0x230] sm:$0xf]
        %v2869 = vld [vmem:[#allocation4 + $0x234] sm:$0xf]
        %v2870 = vld [vmem:[#allocation4 + $0x238] sm:$0xf]
        %v2871 = vld [vmem:[#allocation4 + $0x23c] sm:$0xf]
        %v2872 = vunpack.c.l.b16 %v2803
        %v2873 = vunpack.c.l.b16 %v2806
        %v2874 = vunpack.c.l.b16 %v2810
        %v2875 = vunpack.c.l.b16 %v2813
        %v2876 = vunpack.c.l.b16 %v2817
        %v2877 = vunpack.c.l.b16 %v2820
        %v2878 = vunpack.c.l.b16 %v2824
        %v2879 = vunpack.c.l.b16 %v2827
        %v2880 = vunpack.c.l.b16 %v2831
        %v2881 = vunpack.c.l.b16 %v2834
        %v2882 = vunpack.c.l.b16 %v2838
        %v2883 = vunpack.c.l.b16 %v2841
        %v2884 = vunpack.c.l.b16 %v2845
        %v2885 = vunpack.c.l.b16 %v2848
        %v2886 = vunpack.c.l.b16 %v2852
        %v2887 = vunpack.c.l.b16 %v2855
        %v2888 = vpack.c.b16 %v2873, %v2872
        %v2889 = vpack.c.b16 %v2875, %v2874
        %v2890 = vpack.c.b16 %v2877, %v2876
        %v2891 = vpack.c.b16 %v2879, %v2878
        %v2892 = vpack.c.b16 %v2881, %v2880
        %v2893 = vpack.c.b16 %v2883, %v2882
        %v2894 = vpack.c.b16 %v2885, %v2884
        %v2895 = vpack.c.b16 %v2887, %v2886
        %v2920 = vunpack.c.l.b16 %v2856
        %v2921 = vunpack.c.l.b16 %v2857
        %v2922 = vunpack.c.l.b16 %v2858
        %v2923 = vunpack.c.l.b16 %v2859
        %v2924 = vunpack.c.l.b16 %v2860
        %v2925 = vunpack.c.l.b16 %v2861
        %v2926 = vunpack.c.l.b16 %v2862
        %v2927 = vunpack.c.l.b16 %v2863
        %v2928 = vunpack.c.l.b16 %v2864
        %v2929 = vunpack.c.l.b16 %v2865
        %v2930 = vunpack.c.l.b16 %v2866
        %v2931 = vunpack.c.l.b16 %v2867
        %v2932 = vunpack.c.l.b16 %v2868
        %v2933 = vunpack.c.l.b16 %v2869
        %v2934 = vunpack.c.l.b16 %v2870
        %v2935 = vunpack.c.l.b16 %v2871
        %v2936 = vpack.c.b16 %v2921, %v2920
        %v2937 = vpack.c.b16 %v2923, %v2922
        %v2938 = vpack.c.b16 %v2925, %v2924
        %v2939 = vpack.c.b16 %v2927, %v2926
        %v2940 = vpack.c.b16 %v2929, %v2928
        %v2941 = vpack.c.b16 %v2931, %v2930
        %v2942 = vpack.c.b16 %v2933, %v2932
        %v2943 = vpack.c.b16 %v2935, %v2934
        %2952 = vmatprep.subr.bf16.mxu0 0
        %2953 = vmatpush1.bf16.msra.mxu0 %v2943
        %2954 = vmatprep.subr.bf16.mxu0 0
        %2955 = vmatpush1.bf16.msra.mxu0 %v2942
        %2956 = vmatprep.subr.bf16.mxu0 0
        %2957 = vmatpush1.bf16.msra.mxu0 %v2941
        %2958 = vmatprep.subr.bf16.mxu0 0
        %2959 = vmatpush1.bf16.msra.mxu0 %v2940
        %2960 = vmatprep.subr.bf16.mxu0 0
        %2961 = vmatpush1.bf16.msra.mxu0 %v2939
        %2962 = vmatprep.subr.bf16.mxu0 0
        %2963 = vmatpush1.bf16.msra.mxu0 %v2938
        %2964 = vmatprep.subr.bf16.mxu0 0
        %2965 = vmatpush1.bf16.msra.mxu0 %v2937
        %2966 = vmatprep.subr.bf16.mxu0 0
        %2967 = vmatpush1.bf16.msra.mxu0 %v2936
        %2968 = vmatprep.subr.bf16.mxu0 0
        %2969 = vmatpush2.bf16.msra.mxu0 0
        %2970 = vmatprep.subr.bf16.mxu0 0
        %2971 = vmatpush2.bf16.msra.mxu0 0
        %2972 = vmatprep.subr.bf16.mxu0 0
        %2973 = vmatpush2.bf16.msra.mxu0 0
        %2974 = vmatprep.subr.bf16.mxu0 0
        %2975 = vmatpush2.bf16.msra.mxu0 0
        %2976 = vmatprep.subr.bf16.mxu0 0
        %2977 = vmatpush2.bf16.msra.mxu0 0
        %2978 = vmatprep.subr.bf16.mxu0 0
        %2979 = vmatpush2.bf16.msra.mxu0 0
        %2980 = vmatprep.subr.bf16.mxu0 0
        %2981 = vmatpush2.bf16.msra.mxu0 0
        %2982 = vmatprep.subr.bf16.mxu0 0
        %2983 = vmatpush2.bf16.msra.mxu0 0
        %2984 = vmatprep.mubr.bf16.mxu0 0
        %2985 = vmatmul.mubr.bf16.gmra.mxu0 %v2888
        %v2986 = vpop.f32.mrf.mxu0
        %v2987 = vadd.f32 0.0, %v2986
        %v2988 = vpop.f32.mrf.mxu0
        %v2989 = vpop.f32.mrf.mxu0
        %v2990 = vadd.f32 0.0, %v2989
        %v2991 = vpop.f32.mrf.mxu0
        %2992 = vmatprep.mubr.bf16.mxu0 0
        %2993 = vmatmul.mubr.bf16.gmra.mxu0 %v2889
        %v2994 = vpop.f32.mrf.mxu0
        %v2995 = vadd.f32 0.0, %v2994
        %v2996 = vpop.f32.mrf.mxu0
        %v2997 = vpop.f32.mrf.mxu0
        %v2998 = vadd.f32 0.0, %v2997
        %v2999 = vpop.f32.mrf.mxu0
        %3000 = vmatprep.mubr.bf16.mxu0 0
        %3001 = vmatmul.mubr.bf16.gmra.mxu0 %v2890
        %v3002 = vpop.f32.mrf.mxu0
        %v3003 = vadd.f32 0.0, %v3002
        %v3004 = vpop.f32.mrf.mxu0
        %v3005 = vpop.f32.mrf.mxu0
        %v3006 = vadd.f32 0.0, %v3005
        %v3007 = vpop.f32.mrf.mxu0
        %3008 = vmatprep.mubr.bf16.mxu0 0
        %3009 = vmatmul.mubr.bf16.gmra.mxu0 %v2891
        %v3010 = vpop.f32.mrf.mxu0
        %v3011 = vadd.f32 0.0, %v3010
        %v3012 = vpop.f32.mrf.mxu0
        %v3013 = vpop.f32.mrf.mxu0
        %v3014 = vadd.f32 0.0, %v3013
        %v3015 = vpop.f32.mrf.mxu0
        %3016 = vmatprep.mubr.bf16.mxu0 0
        %3017 = vmatmul.mubr.bf16.gmra.mxu0 %v2892
        %v3018 = vpop.f32.mrf.mxu0
        %v3019 = vadd.f32 0.0, %v3018
        %v3020 = vpop.f32.mrf.mxu0
        %v3021 = vpop.f32.mrf.mxu0
        %v3022 = vadd.f32 0.0, %v3021
        %v3023 = vpop.f32.mrf.mxu0
        %3024 = vmatprep.mubr.bf16.mxu0 0
        %3025 = vmatmul.mubr.bf16.gmra.mxu0 %v2893
        %v3026 = vpop.f32.mrf.mxu0
        %v3027 = vadd.f32 0.0, %v3026
        %v3028 = vpop.f32.mrf.mxu0
        %v3029 = vpop.f32.mrf.mxu0
        %v3030 = vadd.f32 0.0, %v3029
        %v3031 = vpop.f32.mrf.mxu0
        %3032 = vmatprep.mubr.bf16.mxu0 0
        %3033 = vmatmul.mubr.bf16.gmra.mxu0 %v2894
        %v3034 = vpop.f32.mrf.mxu0
        %v3035 = vadd.f32 0.0, %v3034
        %v3036 = vpop.f32.mrf.mxu0
        %v3037 = vpop.f32.mrf.mxu0
        %v3038 = vadd.f32 0.0, %v3037
        %v3039 = vpop.f32.mrf.mxu0
        %3040 = vmatprep.mubr.bf16.mxu0 0
        %3041 = vmatmul.mubr.bf16.gmra.mxu0 %v2895
        %v3042 = vpop.f32.mrf.mxu0
        %v3043 = vadd.f32 0.0, %v3042
        %v3044 = vpop.f32.mrf.mxu0
        %v3045 = vpop.f32.mrf.mxu0
        %v3046 = vadd.f32 0.0, %v3045
        %v3047 = vpop.f32.mrf.mxu0
        %3048 = vdwg.mxu0
        %v3049 = vadd.f32 %v2752, %v2987
        %v3050 = vadd.f32 %v2753, %v2990
        %v3051 = vadd.f32 %v2754, %v2995
        %v3052 = vadd.f32 %v2755, %v2998
        %v3053 = vadd.f32 %v2756, %v3003
        %v3054 = vadd.f32 %v2757, %v3006
        %v3055 = vadd.f32 %v2758, %v3011
        %v3056 = vadd.f32 %v2759, %v3014
        %v3057 = vadd.f32 %v2760, %v3019
        %v3058 = vadd.f32 %v2761, %v3022
        %v3059 = vadd.f32 %v2762, %v3027
        %v3060 = vadd.f32 %v2763, %v3030
        %v3061 = vadd.f32 %v2764, %v3035
        %v3062 = vadd.f32 %v2765, %v3038
        %v3063 = vadd.f32 %v2766, %v3043
        %v3064 = vadd.f32 %v2767, %v3046
        %v3065 = vld [vmem:[%s2] sm:$0x1]
        %v3067 = vlaneseq
        %v3068 = vshrl.u32 %v3067, 7
        %v3069 = vsub.s32 0, %v3068
        %v3070 = vrot.slane %v3065, %v3069
        %v3072 = vadd.f32 %v3049, %v3070
        %v3073 = vadd.f32 %v3050, %v3070
        %v3074 = vadd.f32 %v3051, %v3070
        %v3075 = vadd.f32 %v3052, %v3070
        %v3076 = vadd.f32 %v3053, %v3070
        %v3077 = vadd.f32 %v3054, %v3070
        %v3078 = vadd.f32 %v3055, %v3070
        %v3079 = vadd.f32 %v3056, %v3070
        %v3080 = vadd.f32 %v3057, %v3070
        %v3081 = vadd.f32 %v3058, %v3070
        %v3082 = vadd.f32 %v3059, %v3070
        %v3083 = vadd.f32 %v3060, %v3070
        %v3084 = vadd.f32 %v3061, %v3070
        %v3085 = vadd.f32 %v3062, %v3070
        %v3086 = vadd.f32 %v3063, %v3070
        %v3087 = vadd.f32 %v3064, %v3070
        %v3088 = vmax.f32 %v3072, 0.0
        %v3089 = vmax.f32 %v3073, 0.0
        %v3090 = vmax.f32 %v3074, 0.0
        %v3091 = vmax.f32 %v3075, 0.0
        %v3092 = vmax.f32 %v3076, 0.0
        %v3093 = vmax.f32 %v3077, 0.0
        %v3094 = vmax.f32 %v3078, 0.0
        %v3095 = vmax.f32 %v3079, 0.0
        %v3096 = vmax.f32 %v3080, 0.0
        %v3097 = vmax.f32 %v3081, 0.0
        %v3098 = vmax.f32 %v3082, 0.0
        %v3099 = vmax.f32 %v3083, 0.0
        %v3100 = vmax.f32 %v3084, 0.0
        %v3101 = vmax.f32 %v3085, 0.0
        %v3102 = vmax.f32 %v3086, 0.0
        %v3103 = vmax.f32 %v3087, 0.0
        %3104 = vst [vmem:[%s151] sm:$0xff] %v3088
        %3105 = vst [vmem:[%s151 + $0x8] sm:$0xff] %v3089
        %3106 = vst [vmem:[%s151 + $0x10] sm:$0xff] %v3090
        %3107 = vst [vmem:[%s151 + $0x18] sm:$0xff] %v3091
        %3108 = vst [vmem:[%s151 + $0x20] sm:$0xff] %v3092
        %3109 = vst [vmem:[%s151 + $0x28] sm:$0xff] %v3093
        %3110 = vst [vmem:[%s151 + $0x30] sm:$0xff] %v3094
        %3111 = vst [vmem:[%s151 + $0x38] sm:$0xff] %v3095
        %3112 = vst [vmem:[%s151 + $0x40] sm:$0xff] %v3096
        %3113 = vst [vmem:[%s151 + $0x48] sm:$0xff] %v3097
        %3114 = vst [vmem:[%s151 + $0x50] sm:$0xff] %v3098
        %3115 = vst [vmem:[%s151 + $0x58] sm:$0xff] %v3099
        %3116 = vst [vmem:[%s151 + $0x60] sm:$0xff] %v3100
        %3117 = vst [vmem:[%s151 + $0x68] sm:$0xff] %v3101
        %3118 = vst [vmem:[%s151 + $0x70] sm:$0xff] %v3102
        %3119 = vst [vmem:[%s151 + $0x78] sm:$0xff] %v3103
        %s3120 = sand.u32 %s82, 1
        %s3121 = scalar_lea.sflag [#allocation6], %s3120
        %s3122 = sand.u32 %s82, 1
        %s3123 = smul.addr %s3122, 128
        %s3124 = scalar_lea.vmem [#allocation7], %s3123
        // Predicated region
        $region49: #{tpu_custom_call.1} parent=27 // pred_check
          %p3125 = pneg %p92
        $region50: #{tpu_custom_call.1} parent=27 // pred_check_branch
          %3127 = sbr.rel (%p3125) target = $region52
        $region51: #{tpu_custom_call.1} parent=27 // pred_region
          %s3128 = smul.u32 8, %s23
          %s3130 = ssub.s32 2048, 2048
          %3131 = vsyncadd %s3121, %s3130
          %s3132 = smul.addr %s3128, 2
          %s3133 = smul.addr %s22, 32
          %s3134 = sadd.s32 %s3132, %s3133
          %s3135 = smul.addr %s3134, 128
          %s3136 = scalar_lea.hbm %s3, %s3135
          %s3137 = sshll.u32 %s3124, 4
          %s3138 = int_to_ptr.vmem [resolvable:$true] %s3137
          %3143 = dma.vmem_to_hbm [thread:$0]  %s3138, 2048, %s3136, %s3121, 128, 128, 8
        $region52: #{tpu_custom_call.1} parent=27 // pred_fallthru
          _
      $region28: #{tpu_custom_call.1} parent=5 // pred_fallthru
        _
      %p3144 = scmp.le.s32.totalorder 2, %s13
      // Predicated region
      $region53: #{tpu_custom_call.1} parent=5 // pred_check
        %p3145 = pneg %p3144
      $region54: #{tpu_custom_call.1} parent=5 // pred_check_branch
        %3147 = sbr.rel (%p3145) target = $region56
      $region55: #{tpu_custom_call.1} parent=5 // pred_region
        %s3148 = ssub.s32 %s13, 2
        // Predicated region
        $region57: #{tpu_custom_call.1} parent=55 // pred_check
          %p3149 = pneg %p98
        $region58: #{tpu_custom_call.1} parent=55 // pred_check_branch
          %3151 = sbr.rel (%p3149) target = $region60
        $region59: #{tpu_custom_call.1} parent=55 // pred_region
          %s3152 = sand.u32 %s83, 1
          %s3153 = scalar_lea.sflag [#allocation6], %s3152
          %s3154 = sand.u32 %s83, 1
          %s3155 = smul.addr %s3154, 128
          %s3156 = scalar_lea.vmem [#allocation7], %s3155
          %3157 = dma.done %s3153, 2048
        $region60: #{tpu_custom_call.1} parent=55 // pred_fallthru
          _
      $region56: #{tpu_custom_call.1} parent=5 // pred_fallthru
        _
    $region6: #{tpu_custom_call.1} parent=1 // loop_footer
      %s17 = sadd.s32 1, %s13
    $region7: #{tpu_custom_call.1} parent=1 // loop_footer_branch
      %12 = sbr.rel target = $region3
    $region8: #{tpu_custom_call.1} parent=1 // loop_exit
      _
    %3158 = vsyncpa [#allocation5], 1
    %s3159 = scalar_lea.sflag [#allocation5], 1
    %3160 = vsyncpa %s3159, 1
    %3161 = vsyncpa [#allocation6], 1
    %s3162 = scalar_lea.sflag [#allocation6], 1
    %3163 = vsyncpa %s3162, 1
  %3164 = vsyncmov [#allocation3]
  %s3165 = vpop.sfrf %3164
  %p3166 = scmp.eq.s32.totalorder %s3165, 0
  %p3167 = pneg %p3166
  %3169 = shalt.err (%p3167)
  %s3170 = scalar_lea.sflag [#allocation3], 1
  %3171 = vsyncmov %s3170
  %s3172 = vpop.sfrf %3171
  %p3173 = scmp.eq.s32.totalorder %s3172, 0
  %p3174 = pneg %p3173
  %3176 = shalt.err (%p3174)

</llo_original>
